<compile_context>
chip_gen: v6e
topology: v6e:2x2x1
jax: 0.10.0
libtpu: 0.0.40
codegen_flags: <defaults>
</compile_context>

<pallas_src>
import functools

import numpy as np

import jax
import jax.numpy as jnp
from jax.experimental import pallas as pl
from jax.experimental.pallas import tpu as pltpu


# ----------------------------------------------------------------------------
# Fused kernel: one grid step == one sample.  conv1 + conv2 + conv3 (+ReLU),
# fused FC stage-1 [adv1|val1], both output heads and the dueling combine.
# ----------------------------------------------------------------------------
def _dueling_dqn_kernel(
    p1_ref,                     # (1, n1, 8*8*Cin) bf16   conv1 im2col patches
    w1_ref, b1_ref,             # (8*8*Cin, 32) bf16, (1, 32) f32   (1/256 folded in)
    g2_ref, w2_ref, b2_ref,     # (16*n2, n1) bf16, (16*32, 64) bf16, (1, 64) f32
    g3_ref, w3_ref, b3_ref,     # (9*n3, n2)  bf16, (9*64, 64)  bf16, (1, 64) f32
    wh1_ref, bh1_ref,           # (n3*64, 512) bf16, (1, 512) f32   [adv1 | val1] fused
    wa2_ref, ba2_ref,           # (256, A) bf16, (1, A) f32
    wv2_ref, bv2_ref,           # (256, 1) bf16, (1, 1) f32
    o_ref,                      # (1, 1, A) f32
    *, n_out2, k2_taps, n_out3, k3_taps,
):
    f32, bf16 = jnp.float32, jnp.bfloat16

    # conv1 (8x8 / stride 4): one matmul over the pre-extracted patches.
    p1 = p1_ref[0]                                               # (n1, 8*8*Cin)
    y1 = jnp.dot(p1, w1_ref[...], preferred_element_type=f32)
    y1 = jnp.maximum(y1 + b1_ref[...], 0.0)                      # (n1, 32)

    # conv2 (4x4 / stride 2): ONE gather matmul for all 16 taps (rows ordered
    # (tap, out_pos)), lane-regroup the tap blocks, then ONE dense K=512 dot.
    z2 = jnp.dot(g2_ref[...], y1.astype(bf16),
                 preferred_element_type=f32)                     # (16*n2, 32)
    patches2 = jnp.concatenate(
        [z2[k * n_out2:(k + 1) * n_out2, :] for k in range(k2_taps)],
        axis=1)                                                  # (n2, 16*32)
    y2 = jnp.dot(patches2.astype(bf16), w2_ref[...], preferred_element_type=f32)
    y2 = jnp.maximum(y2 + b2_ref[...], 0.0)                      # (n2, 64)

    # conv3 (3x3 / stride 1): same folding, K = 9*64 = 576.
    z3 = jnp.dot(g3_ref[...], y2.astype(bf16),
                 preferred_element_type=f32)                     # (9*n3, 64)
    patches3 = jnp.concatenate(
        [z3[k * n_out3:(k + 1) * n_out3, :] for k in range(k3_taps)],
        axis=1)                                                  # (n3, 9*64)
    y3 = jnp.dot(patches3.astype(bf16), w3_ref[...], preferred_element_type=f32)
    y3 = jnp.maximum(y3 + b3_ref[...], 0.0)                      # (n3, 64)

    # Fused first FC stage: flatten conv3's output to one (1, n3*64) row
    # (position-major; wh1's rows are pre-permuted to match PyTorch's NCHW
    # flatten) and do a single lane-dense K=256 / N=512 matmul -> [h_adv|h_val].
    hin = jnp.concatenate([y3[p:p + 1, :] for p in range(n_out3)], axis=1)
    h = jnp.dot(hin.astype(bf16), wh1_ref[...], preferred_element_type=f32)
    h = jnp.maximum(h + bh1_ref[...], 0.0)                       # (1, 512)

    # Output heads: the 256 split is 128-lane aligned, so the slices are free.
    hidden = wa2_ref.shape[0]
    adv = jnp.dot(h[:, :hidden].astype(bf16), wa2_ref[...],
                  preferred_element_type=f32) + ba2_ref[...]     # (1, A)
    val = jnp.dot(h[:, hidden:].astype(bf16), wv2_ref[...],
                  preferred_element_type=f32) + bv2_ref[...]     # (1, 1)

    # dueling combine: q = val + (adv - mean(adv))
    o_ref[0] = val + (adv - jnp.mean(adv, axis=1, keepdims=True))


_PREP_ORDER = ("w1", "b1", "g2", "w2", "b2", "g3", "w3", "b3",
               "wh1", "bh1", "wa2", "ba2", "wv2", "bv2")


# ----------------------------------------------------------------------------
# XLA glue: conv1 im2col on the raw frame (kernel == 2 * stride => 4 block
# slices + one transpose).  Patch features come out in (ky, kx, cin) order.
# ----------------------------------------------------------------------------
def _conv1_patches(x_nhwc, kk, stride):
    n, h, w, c = x_nhwc.shape
    assert kk == 2 * stride and h % stride == 0 and w % stride == 0
    ho = (h - kk) // stride + 1
    wo = (w - kk) // stride + 1
    xb = x_nhwc.reshape(n, h // stride, stride, w // stride, stride, c)
    slabs = [xb[:, a:a + ho, :, b:b + wo, :, :]
             for a in range(2) for b in range(2)]
    st = jnp.stack(slabs, axis=0).reshape(2, 2, n, ho, stride, wo, stride, c)
    pt = jnp.transpose(st, (2, 3, 5, 0, 4, 1, 6, 7))   # (n, oy, ox, a, r, b, q, c)
    return pt.reshape(n, ho * wo, kk * kk * c)


# ----------------------------------------------------------------------------
# One-time parameter / constant preparation (batch-independent).
# ----------------------------------------------------------------------------
def _gather_stack(h, w, kk, stride):
    """0/1 matrix G (kk*kk*n_out, h*w), rows (tap, out_pos):
       (G @ rows)[k*n_out + m] = rows[(s*oy+ky)*w + (s*ox+kx)]."""
    ho = (h - kk) // stride + 1
    wo = (w - kk) // stride + 1
    n_out = ho * wo
    g = np.zeros((kk * kk * n_out, h * w), dtype=np.float32)
    for ky in range(kk):
        for kx in range(kk):
            k = ky * kk + kx
            for oy in range(ho):
                for ox in range(wo):
                    m = oy * wo + ox
                    src = (stride * oy + ky) * w + (stride * ox + kx)
                    g[k * n_out + m, src] = 1.0
    return g, ho, wo


def prepare_params(params, *, in_shape):
    """Transform PyTorch-layout params into the fused kernel's operands."""
    c_in, hh, ww = in_shape
    f32, bf16 = jnp.float32, jnp.bfloat16

    c1 = params["conv1_w"].shape[0]
    c2 = params["conv2_w"].shape[0]
    c3 = params["conv3_w"].shape[0]

    # conv1 weight: (Cout,Cin,8,8) -> (8*8*Cin, Cout), rows (ky,kx,cin),
    # with the x/256 input scale folded in.
    w1 = jnp.transpose(params["conv1_w"], (2, 3, 1, 0)).reshape(8 * 8 * c_in, c1)
    w1 = w1 * (1.0 / 256.0)
    ho1 = (hh - 8) // 4 + 1
    wo1 = (ww - 8) // 4 + 1

    # conv2/conv3 weights: (Cout,Cin,K,K) -> (K*K*Cin, Cout), rows (ky,kx,cin),
    # matching the lane-regrouped patch matrices produced in the kernel.
    w2 = jnp.transpose(params["conv2_w"], (2, 3, 1, 0)).reshape(4 * 4 * c1, c2)
    g2, ho2, wo2 = _gather_stack(ho1, wo1, 4, 2)
    w3 = jnp.transpose(params["conv3_w"], (2, 3, 1, 0)).reshape(3 * 3 * c2, c3)
    g3, ho3, wo3 = _gather_stack(ho2, wo2, 3, 1)

    n_pos = ho3 * wo3
    n_actions = params["adv2_w"].shape[0]

    # Fused first FC stage [adv1 | val1].  PyTorch flattens conv_out as
    # feature = c*n_pos + p (NCHW); the kernel builds (p, c) order, so fold
    # the permutation into the weight rows.
    w_cat = jnp.concatenate([params["adv1_w"].T, params["val1_w"].T], axis=1)
    perm = np.asarray([c * n_pos + p for p in range(n_pos) for c in range(c3)])
    wh1 = w_cat[perm, :]                                    # (n_pos*c3, 512)
    bh1 = jnp.concatenate([params["adv1_b"], params["val1_b"]]).reshape(1, -1)

    return {
        "w1": w1.astype(bf16),
        "b1": params["conv1_b"].reshape(1, c1).astype(f32),
        "g2": jnp.asarray(g2, bf16), "w2": w2.astype(bf16),
        "b2": params["conv2_b"].reshape(1, c2).astype(f32),
        "g3": jnp.asarray(g3, bf16), "w3": w3.astype(bf16),
        "b3": params["conv3_b"].reshape(1, c3).astype(f32),
        "wh1": wh1.astype(bf16), "bh1": bh1.astype(f32),
        "wa2": params["adv2_w"].T.astype(bf16),
        "ba2": params["adv2_b"].reshape(1, n_actions).astype(f32),
        "wv2": params["val2_w"].T.astype(bf16),
        "bv2": params["val2_b"].reshape(1, 1).astype(f32),
    }


def _resident_spec(arr):
    nd = arr.ndim
    return pl.BlockSpec(arr.shape, lambda b, _nd=nd: (0,) * _nd)


# ----------------------------------------------------------------------------
# Forward pass: a few XLA data-reordering ops + ONE pallas_call, grid = batch.
# ----------------------------------------------------------------------------
@jax.jit
def dueling_dqn_forward(x_nchw, prep):
    """x_nchw: uint8 (B, C, H, W)  ->  q-values (B, n_actions) float32."""
    batch = x_nchw.shape[0]
    x = jnp.transpose(x_nchw.astype(jnp.float32), (0, 2, 3, 1))       # NHWC
    patches1 = _conv1_patches(x, kk=8, stride=4).astype(jnp.bfloat16)  # (B,n1,K1)
    _, n1, k1 = patches1.shape

    # static geometry, recovered from the prepared operand shapes
    c1 = prep["w1"].shape[1]
    c2 = prep["w2"].shape[1]
    c3 = prep["w3"].shape[1]
    k2_taps = prep["w2"].shape[0] // c1
    n_out2 = prep["g2"].shape[0] // k2_taps
    k3_taps = prep["w3"].shape[0] // c2
    n_out3 = prep["g3"].shape[0] // k3_taps
    hidden = prep["wa2"].shape[0]
    n_actions = prep["wa2"].shape[1]

    kernel = functools.partial(
        _dueling_dqn_kernel, n_out2=n_out2, k2_taps=k2_taps,
        n_out3=n_out3, k3_taps=k3_taps)

    weights = tuple(prep[k] for k in _PREP_ORDER)
    in_specs = ([pl.BlockSpec((1, n1, k1), lambda b: (b, 0, 0))]
                + [_resident_spec(a) for a in weights])

    flops = 2 * batch * (
        n1 * k1 * c1                                            # conv1
        + prep["g2"].shape[0] * prep["g2"].shape[1] * c1        # conv2 gather
        + n_out2 * prep["w2"].shape[0] * c2                     # conv2 dense
        + prep["g3"].shape[0] * prep["g3"].shape[1] * c2        # conv3 gather
        + n_out3 * prep["w3"].shape[0] * c3                     # conv3 dense
        + prep["wh1"].shape[0] * prep["wh1"].shape[1]           # fused fc1
        + hidden * n_actions + hidden)                          # heads
    bytes_accessed = (patches1.size * 2
                      + sum(a.size * a.dtype.itemsize for a in weights)
                      + batch * n_actions * 4)

    out = pl.pallas_call(
        kernel,
        out_shape=jax.ShapeDtypeStruct((batch, 1, n_actions), jnp.float32),
        grid=(batch,),
        in_specs=in_specs,
        out_specs=pl.BlockSpec((1, 1, n_actions), lambda b: (b, 0, 0)),
        compiler_params=pltpu.CompilerParams(
            dimension_semantics=("parallel",),        # shards batch on v7x's 2 TCs
            vmem_limit_bytes=16 * 1024 * 1024),       # footprint is ~1 MiB
        cost_estimate=pl.CostEstimate(
            flops=int(flops), transcendentals=0,
            bytes_accessed=int(bytes_accessed)),
    )(patches1, *weights)
    return out.reshape(batch, n_actions)


# ----------------------------------------------------------------------------
# Plain-JAX reference of the PyTorch module (for the numerical self-check).
# ----------------------------------------------------------------------------
def _reference_forward(x_nchw, params):
    hp = jax.lax.Precision.HIGHEST
    y = x_nchw.astype(jnp.float32) / 256.0
    for wn, bn, s in (("conv1_w", "conv1_b", 4),
                      ("conv2_w", "conv2_b", 2),
                      ("conv3_w", "conv3_b", 1)):
        y = jax.lax.conv_general_dilated(
            y, params[wn], window_strides=(s, s), padding="VALID",
            dimension_numbers=("NCHW", "OIHW", "NCHW"), precision=hp)
        y = jnp.maximum(y + params[bn].reshape(1, -1, 1, 1), 0.0)
    co = y.reshape(y.shape[0], -1)
    h_adv = jnp.maximum(
        jnp.dot(co, params["adv1_w"].T, precision=hp) + params["adv1_b"], 0.0)
    adv = jnp.dot(h_adv, params["adv2_w"].T, precision=hp) + params["adv2_b"]
    h_val = jnp.maximum(
        jnp.dot(co, params["val1_w"].T, precision=hp) + params["val1_b"], 0.0)
    val = jnp.dot(h_val, params["val2_w"].T, precision=hp) + params["val2_b"]
    return val + (adv - adv.mean(axis=1, keepdims=True))


# ----------------------------------------------------------------------------
# Deterministic parameter construction (synthetic weights, PyTorch shapes)
# ----------------------------------------------------------------------------
def init_params(key, in_channels, conv_out_size, n_actions):
    ks = jax.random.split(key, 14)
    s = 0.05

    def nrm(k, shape):
        return jax.random.normal(k, shape, dtype=jnp.float32) * s

    return {
        "conv1_w": nrm(ks[0], (32, in_channels, 8, 8)),
        "conv1_b": nrm(ks[1], (32,)),
        "conv2_w": nrm(ks[2], (64, 32, 4, 4)),
        "conv2_b": nrm(ks[3], (64,)),
        "conv3_w": nrm(ks[4], (64, 64, 3, 3)),
        "conv3_b": nrm(ks[5], (64,)),
        "adv1_w": nrm(ks[6], (256, conv_out_size)),
        "adv1_b": nrm(ks[7], (256,)),
        "adv2_w": nrm(ks[8], (n_actions, 256)),
        "adv2_b": nrm(ks[9], (n_actions,)),
        "val1_w": nrm(ks[10], (256, conv_out_size)),
        "val1_b": nrm(ks[11], (256,)),
        "val2_w": nrm(ks[12], (1, 256)),
        "val2_b": nrm(ks[13], (1,)),
    }


if __name__ == "__main__":
    # Small input consistent with the conv stack:
    # H = W = 44 -> conv1: 10x10, conv2: 4x4, conv3: 2x2 -> conv_out = 64*2*2
    batch, channels, H, W = 2, 4, 44, 44
    n_actions = 6
    conv_out_size = 64 * 2 * 2

    key = jax.random.PRNGKey(0)
    k_x, k_p = jax.random.split(key)

    # uint8 "frames", like Atari observations fed to DuelingDQN
    x = jax.random.randint(k_x, (batch, channels, H, W), 0, 256,
                           dtype=jnp.int32).astype(jnp.uint8)
    params = init_params(k_p, channels, conv_out_size, n_actions)

    # one-time, batch-independent weight / gather-matrix preparation
    prep = prepare_params(params, in_shape=(channels, H, W))

    q_values = dueling_dqn_forward(x, prep)
    q_values = jax.block_until_ready(q_values)

    assert q_values.shape == (batch, n_actions)
    assert q_values.dtype == jnp.float32

    # numerical self-check against the plain-JAX reference of the module
    q_ref = _reference_forward(x, params)
    np.testing.assert_allclose(np.asarray(q_values), np.asarray(q_ref),
                               rtol=2e-2, atol=2e-2)

    print("KERNEL_OK")
</pallas_src>

<mosaic_0001>
module attributes {stable_mosaic.version = 11 : i64} {
  func.func @_dueling_dqn_kernel(%arg0: i32, %arg1: memref<1x100x256xbf16, #tpu.memory_space<vmem>>, %arg2: memref<256x32xbf16, #tpu.memory_space<vmem>>, %arg3: memref<1x32xf32, #tpu.memory_space<vmem>>, %arg4: memref<256x100xbf16, #tpu.memory_space<vmem>>, %arg5: memref<512x64xbf16, #tpu.memory_space<vmem>>, %arg6: memref<1x64xf32, #tpu.memory_space<vmem>>, %arg7: memref<36x16xbf16, #tpu.memory_space<vmem>>, %arg8: memref<576x64xbf16, #tpu.memory_space<vmem>>, %arg9: memref<1x64xf32, #tpu.memory_space<vmem>>, %arg10: memref<256x512xbf16, #tpu.memory_space<vmem>>, %arg11: memref<1x512xf32, #tpu.memory_space<vmem>>, %arg12: memref<256x6xbf16, #tpu.memory_space<vmem>>, %arg13: memref<1x6xf32, #tpu.memory_space<vmem>>, %arg14: memref<256x1xbf16, #tpu.memory_space<vmem>>, %arg15: memref<1x1xf32, #tpu.memory_space<vmem>>, %arg16: memref<1x1x6xf32, #tpu.memory_space<vmem>>) attributes {dimension_semantics = [#tpu.dimension_semantics<parallel>], iteration_bounds = array<i64: 2>, scalar_prefetch = 0 : i64, scratch_operands = 0 : i64, tpu.core_type = #tpu.core_type<tc>, window_params = [{transform_indices = @transform_0, window_bounds = array<i64: 1, 100, 256>}, {pipeline_mode = #tpu.pipeline_mode<synchronous>, transform_indices = @transform_1, window_bounds = array<i64: 256, 32>}, {pipeline_mode = #tpu.pipeline_mode<synchronous>, transform_indices = @transform_2, window_bounds = array<i64: 1, 32>}, {pipeline_mode = #tpu.pipeline_mode<synchronous>, transform_indices = @transform_3, window_bounds = array<i64: 256, 100>}, {pipeline_mode = #tpu.pipeline_mode<synchronous>, transform_indices = @transform_4, window_bounds = array<i64: 512, 64>}, {pipeline_mode = #tpu.pipeline_mode<synchronous>, transform_indices = @transform_5, window_bounds = array<i64: 1, 64>}, {pipeline_mode = #tpu.pipeline_mode<synchronous>, transform_indices = @transform_6, window_bounds = array<i64: 36, 16>}, {pipeline_mode = #tpu.pipeline_mode<synchronous>, transform_indices = @transform_7, window_bounds = array<i64: 576, 64>}, {pipeline_mode = #tpu.pipeline_mode<synchronous>, transform_indices = @transform_8, window_bounds = array<i64: 1, 64>}, {pipeline_mode = #tpu.pipeline_mode<synchronous>, transform_indices = @transform_9, window_bounds = array<i64: 256, 512>}, {pipeline_mode = #tpu.pipeline_mode<synchronous>, transform_indices = @transform_10, window_bounds = array<i64: 1, 512>}, {pipeline_mode = #tpu.pipeline_mode<synchronous>, transform_indices = @transform_11, window_bounds = array<i64: 256, 6>}, {pipeline_mode = #tpu.pipeline_mode<synchronous>, transform_indices = @transform_12, window_bounds = array<i64: 1, 6>}, {pipeline_mode = #tpu.pipeline_mode<synchronous>, transform_indices = @transform_13, window_bounds = array<i64: 256, 1>}, {pipeline_mode = #tpu.pipeline_mode<synchronous>, transform_indices = @transform_14, window_bounds = array<i64: 1, 1>}, {transform_indices = @transform_15, window_bounds = array<i64: 1, 1, 6>}]} {
    %c0 = arith.constant 0 : index
    %c0_0 = arith.constant 0 : index
    %c0_1 = arith.constant 0 : index
    %0 = vector.load %arg1[%c0, %c0_0, %c0_1] : memref<1x100x256xbf16, #tpu.memory_space<vmem>>, vector<1x100x256xbf16>
    %1 = vector.shape_cast %0 : vector<1x100x256xbf16> to vector<100x256xbf16>
    %c0_2 = arith.constant 0 : index
    %c0_3 = arith.constant 0 : index
    %2 = vector.load %arg2[%c0_2, %c0_3] : memref<256x32xbf16, #tpu.memory_space<vmem>>, vector<256x32xbf16>
    %cst = arith.constant dense<0.000000e+00> : vector<100x32xf32>
    %3 = tpu.matmul %1, %2, %cst {dimension_numbers = #tpu.dot_dimension_numbers<[1], [0], [0], [1], [0, 0, 1, 1], [], []>} : vector<100x256xbf16>, vector<256x32xbf16>, vector<100x32xf32> -> vector<100x32xf32>
    %c0_4 = arith.constant 0 : index
    %c0_5 = arith.constant 0 : index
    %4 = vector.load %arg3[%c0_4, %c0_5] : memref<1x32xf32, #tpu.memory_space<vmem>>, vector<1x32xf32>
    %5 = vector.broadcast %4 : vector<1x32xf32> to vector<100x32xf32>
    %6 = arith.addf %3, %5 : vector<100x32xf32>
    %cst_6 = arith.constant 0.000000e+00 : f32
    %7 = vector.broadcast %cst_6 : f32 to vector<100x32xf32>
    %8 = arith.maximumf %6, %7 : vector<100x32xf32>
    %c0_7 = arith.constant 0 : index
    %c0_8 = arith.constant 0 : index
    %9 = vector.load %arg4[%c0_7, %c0_8] : memref<256x100xbf16, #tpu.memory_space<vmem>>, vector<256x100xbf16>
    %10 = arith.truncf %8 : vector<100x32xf32> to vector<100x32xbf16>
    %cst_9 = arith.constant dense<0.000000e+00> : vector<256x32xf32>
    %11 = tpu.matmul %9, %10, %cst_9 {dimension_numbers = #tpu.dot_dimension_numbers<[1], [0], [0], [1], [0, 0, 1, 1], [], []>} : vector<256x100xbf16>, vector<100x32xbf16>, vector<256x32xf32> -> vector<256x32xf32>
    %12 = vector.extract_strided_slice %11 {offsets = [0, 0], sizes = [16, 32], strides = [1, 1]} : vector<256x32xf32> to vector<16x32xf32>
    %13 = vector.extract_strided_slice %11 {offsets = [16, 0], sizes = [16, 32], strides = [1, 1]} : vector<256x32xf32> to vector<16x32xf32>
    %14 = vector.extract_strided_slice %11 {offsets = [32, 0], sizes = [16, 32], strides = [1, 1]} : vector<256x32xf32> to vector<16x32xf32>
    %15 = vector.extract_strided_slice %11 {offsets = [48, 0], sizes = [16, 32], strides = [1, 1]} : vector<256x32xf32> to vector<16x32xf32>
    %16 = vector.extract_strided_slice %11 {offsets = [64, 0], sizes = [16, 32], strides = [1, 1]} : vector<256x32xf32> to vector<16x32xf32>
    %17 = vector.extract_strided_slice %11 {offsets = [80, 0], sizes = [16, 32], strides = [1, 1]} : vector<256x32xf32> to vector<16x32xf32>
    %18 = vector.extract_strided_slice %11 {offsets = [96, 0], sizes = [16, 32], strides = [1, 1]} : vector<256x32xf32> to vector<16x32xf32>
    %19 = vector.extract_strided_slice %11 {offsets = [112, 0], sizes = [16, 32], strides = [1, 1]} : vector<256x32xf32> to vector<16x32xf32>
    %20 = vector.extract_strided_slice %11 {offsets = [128, 0], sizes = [16, 32], strides = [1, 1]} : vector<256x32xf32> to vector<16x32xf32>
    %21 = vector.extract_strided_slice %11 {offsets = [144, 0], sizes = [16, 32], strides = [1, 1]} : vector<256x32xf32> to vector<16x32xf32>
    %22 = vector.extract_strided_slice %11 {offsets = [160, 0], sizes = [16, 32], strides = [1, 1]} : vector<256x32xf32> to vector<16x32xf32>
    %23 = vector.extract_strided_slice %11 {offsets = [176, 0], sizes = [16, 32], strides = [1, 1]} : vector<256x32xf32> to vector<16x32xf32>
    %24 = vector.extract_strided_slice %11 {offsets = [192, 0], sizes = [16, 32], strides = [1, 1]} : vector<256x32xf32> to vector<16x32xf32>
    %25 = vector.extract_strided_slice %11 {offsets = [208, 0], sizes = [16, 32], strides = [1, 1]} : vector<256x32xf32> to vector<16x32xf32>
    %26 = vector.extract_strided_slice %11 {offsets = [224, 0], sizes = [16, 32], strides = [1, 1]} : vector<256x32xf32> to vector<16x32xf32>
    %27 = vector.extract_strided_slice %11 {offsets = [240, 0], sizes = [16, 32], strides = [1, 1]} : vector<256x32xf32> to vector<16x32xf32>
    %28 = tpu.concatenate %12, %13, %14, %15, %16, %17, %18, %19, %20, %21, %22, %23, %24, %25, %26, %27 in 1 : vector<16x32xf32>, vector<16x32xf32>, vector<16x32xf32>, vector<16x32xf32>, vector<16x32xf32>, vector<16x32xf32>, vector<16x32xf32>, vector<16x32xf32>, vector<16x32xf32>, vector<16x32xf32>, vector<16x32xf32>, vector<16x32xf32>, vector<16x32xf32>, vector<16x32xf32>, vector<16x32xf32>, vector<16x32xf32> -> vector<16x512xf32>
    %29 = arith.truncf %28 : vector<16x512xf32> to vector<16x512xbf16>
    %c0_10 = arith.constant 0 : index
    %c0_11 = arith.constant 0 : index
    %30 = vector.load %arg5[%c0_10, %c0_11] : memref<512x64xbf16, #tpu.memory_space<vmem>>, vector<512x64xbf16>
    %cst_12 = arith.constant dense<0.000000e+00> : vector<16x64xf32>
    %31 = tpu.matmul %29, %30, %cst_12 {dimension_numbers = #tpu.dot_dimension_numbers<[1], [0], [0], [1], [0, 0, 1, 1], [], []>} : vector<16x512xbf16>, vector<512x64xbf16>, vector<16x64xf32> -> vector<16x64xf32>
    %c0_13 = arith.constant 0 : index
    %c0_14 = arith.constant 0 : index
    %32 = vector.load %arg6[%c0_13, %c0_14] : memref<1x64xf32, #tpu.memory_space<vmem>>, vector<1x64xf32>
    %33 = vector.broadcast %32 : vector<1x64xf32> to vector<16x64xf32>
    %34 = arith.addf %31, %33 : vector<16x64xf32>
    %cst_15 = arith.constant 0.000000e+00 : f32
    %35 = vector.broadcast %cst_15 : f32 to vector<16x64xf32>
    %36 = arith.maximumf %34, %35 : vector<16x64xf32>
    %c0_16 = arith.constant 0 : index
    %c0_17 = arith.constant 0 : index
    %37 = vector.load %arg7[%c0_16, %c0_17] : memref<36x16xbf16, #tpu.memory_space<vmem>>, vector<36x16xbf16>
    %38 = arith.truncf %36 : vector<16x64xf32> to vector<16x64xbf16>
    %cst_18 = arith.constant dense<0.000000e+00> : vector<36x64xf32>
    %39 = tpu.matmul %37, %38, %cst_18 {dimension_numbers = #tpu.dot_dimension_numbers<[1], [0], [0], [1], [0, 0, 1, 1], [], []>} : vector<36x16xbf16>, vector<16x64xbf16>, vector<36x64xf32> -> vector<36x64xf32>
    %40 = vector.extract_strided_slice %39 {offsets = [0, 0], sizes = [4, 64], strides = [1, 1]} : vector<36x64xf32> to vector<4x64xf32>
    %41 = vector.extract_strided_slice %39 {offsets = [4, 0], sizes = [4, 64], strides = [1, 1]} : vector<36x64xf32> to vector<4x64xf32>
    %42 = vector.extract_strided_slice %39 {offsets = [8, 0], sizes = [4, 64], strides = [1, 1]} : vector<36x64xf32> to vector<4x64xf32>
    %43 = vector.extract_strided_slice %39 {offsets = [12, 0], sizes = [4, 64], strides = [1, 1]} : vector<36x64xf32> to vector<4x64xf32>
    %44 = vector.extract_strided_slice %39 {offsets = [16, 0], sizes = [4, 64], strides = [1, 1]} : vector<36x64xf32> to vector<4x64xf32>
    %45 = vector.extract_strided_slice %39 {offsets = [20, 0], sizes = [4, 64], strides = [1, 1]} : vector<36x64xf32> to vector<4x64xf32>
    %46 = vector.extract_strided_slice %39 {offsets = [24, 0], sizes = [4, 64], strides = [1, 1]} : vector<36x64xf32> to vector<4x64xf32>
    %47 = vector.extract_strided_slice %39 {offsets = [28, 0], sizes = [4, 64], strides = [1, 1]} : vector<36x64xf32> to vector<4x64xf32>
    %48 = vector.extract_strided_slice %39 {offsets = [32, 0], sizes = [4, 64], strides = [1, 1]} : vector<36x64xf32> to vector<4x64xf32>
    %49 = tpu.concatenate %40, %41, %42, %43, %44, %45, %46, %47, %48 in 1 : vector<4x64xf32>, vector<4x64xf32>, vector<4x64xf32>, vector<4x64xf32>, vector<4x64xf32>, vector<4x64xf32>, vector<4x64xf32>, vector<4x64xf32>, vector<4x64xf32> -> vector<4x576xf32>
    %50 = arith.truncf %49 : vector<4x576xf32> to vector<4x576xbf16>
    %c0_19 = arith.constant 0 : index
    %c0_20 = arith.constant 0 : index
    %51 = vector.load %arg8[%c0_19, %c0_20] : memref<576x64xbf16, #tpu.memory_space<vmem>>, vector<576x64xbf16>
    %cst_21 = arith.constant dense<0.000000e+00> : vector<4x64xf32>
    %52 = tpu.matmul %50, %51, %cst_21 {dimension_numbers = #tpu.dot_dimension_numbers<[1], [0], [0], [1], [0, 0, 1, 1], [], []>} : vector<4x576xbf16>, vector<576x64xbf16>, vector<4x64xf32> -> vector<4x64xf32>
    %c0_22 = arith.constant 0 : index
    %c0_23 = arith.constant 0 : index
    %53 = vector.load %arg9[%c0_22, %c0_23] : memref<1x64xf32, #tpu.memory_space<vmem>>, vector<1x64xf32>
    %54 = vector.broadcast %53 : vector<1x64xf32> to vector<4x64xf32>
    %55 = arith.addf %52, %54 : vector<4x64xf32>
    %cst_24 = arith.constant 0.000000e+00 : f32
    %56 = vector.broadcast %cst_24 : f32 to vector<4x64xf32>
    %57 = arith.maximumf %55, %56 : vector<4x64xf32>
    %58 = vector.extract_strided_slice %57 {offsets = [0, 0], sizes = [1, 64], strides = [1, 1]} : vector<4x64xf32> to vector<1x64xf32>
    %59 = vector.extract_strided_slice %57 {offsets = [1, 0], sizes = [1, 64], strides = [1, 1]} : vector<4x64xf32> to vector<1x64xf32>
    %60 = vector.extract_strided_slice %57 {offsets = [2, 0], sizes = [1, 64], strides = [1, 1]} : vector<4x64xf32> to vector<1x64xf32>
    %61 = vector.extract_strided_slice %57 {offsets = [3, 0], sizes = [1, 64], strides = [1, 1]} : vector<4x64xf32> to vector<1x64xf32>
    %62 = tpu.concatenate %58, %59, %60, %61 in 1 : vector<1x64xf32>, vector<1x64xf32>, vector<1x64xf32>, vector<1x64xf32> -> vector<1x256xf32>
    %63 = arith.truncf %62 : vector<1x256xf32> to vector<1x256xbf16>
    %c0_25 = arith.constant 0 : index
    %c0_26 = arith.constant 0 : index
    %64 = vector.load %arg10[%c0_25, %c0_26] : memref<256x512xbf16, #tpu.memory_space<vmem>>, vector<256x512xbf16>
    %cst_27 = arith.constant dense<0.000000e+00> : vector<1x512xf32>
    %65 = tpu.matmul %63, %64, %cst_27 {dimension_numbers = #tpu.dot_dimension_numbers<[1], [0], [0], [1], [0, 0, 1, 1], [], []>} : vector<1x256xbf16>, vector<256x512xbf16>, vector<1x512xf32> -> vector<1x512xf32>
    %c0_28 = arith.constant 0 : index
    %c0_29 = arith.constant 0 : index
    %66 = vector.load %arg11[%c0_28, %c0_29] : memref<1x512xf32, #tpu.memory_space<vmem>>, vector<1x512xf32>
    %67 = arith.addf %65, %66 : vector<1x512xf32>
    %cst_30 = arith.constant 0.000000e+00 : f32
    %68 = vector.broadcast %cst_30 : f32 to vector<1x512xf32>
    %69 = arith.maximumf %67, %68 : vector<1x512xf32>
    %70 = vector.extract_strided_slice %69 {offsets = [0, 0], sizes = [1, 256], strides = [1, 1]} : vector<1x512xf32> to vector<1x256xf32>
    %71 = arith.truncf %70 : vector<1x256xf32> to vector<1x256xbf16>
    %c0_31 = arith.constant 0 : index
    %c0_32 = arith.constant 0 : index
    %72 = vector.load %arg12[%c0_31, %c0_32] : memref<256x6xbf16, #tpu.memory_space<vmem>>, vector<256x6xbf16>
    %cst_33 = arith.constant dense<0.000000e+00> : vector<1x6xf32>
    %73 = tpu.matmul %71, %72, %cst_33 {dimension_numbers = #tpu.dot_dimension_numbers<[1], [0], [0], [1], [0, 0, 1, 1], [], []>} : vector<1x256xbf16>, vector<256x6xbf16>, vector<1x6xf32> -> vector<1x6xf32>
    %c0_34 = arith.constant 0 : index
    %c0_35 = arith.constant 0 : index
    %74 = vector.load %arg13[%c0_34, %c0_35] : memref<1x6xf32, #tpu.memory_space<vmem>>, vector<1x6xf32>
    %75 = arith.addf %73, %74 : vector<1x6xf32>
    %76 = vector.extract_strided_slice %69 {offsets = [0, 256], sizes = [1, 256], strides = [1, 1]} : vector<1x512xf32> to vector<1x256xf32>
    %77 = arith.truncf %76 : vector<1x256xf32> to vector<1x256xbf16>
    %c0_36 = arith.constant 0 : index
    %c0_37 = arith.constant 0 : index
    %78 = vector.load %arg14[%c0_36, %c0_37] : memref<256x1xbf16, #tpu.memory_space<vmem>>, vector<256x1xbf16>
    %cst_38 = arith.constant dense<0.000000e+00> : vector<1x1xf32>
    %79 = tpu.matmul %77, %78, %cst_38 {dimension_numbers = #tpu.dot_dimension_numbers<[1], [0], [0], [1], [0, 0, 1, 1], [], []>} : vector<1x256xbf16>, vector<256x1xbf16>, vector<1x1xf32> -> vector<1x1xf32>
    %c0_39 = arith.constant 0 : index
    %c0_40 = arith.constant 0 : index
    %80 = vector.load %arg15[%c0_39, %c0_40] : memref<1x1xf32, #tpu.memory_space<vmem>>, vector<1x1xf32>
    %81 = arith.addf %79, %80 : vector<1x1xf32>
    %cst_41 = arith.constant dense<0.000000e+00> : vector<1xf32>
    %82 = vector.multi_reduction <add>, %75, %cst_41 [1] : vector<1x6xf32> to vector<1xf32>
    %83 = vector.shape_cast %82 : vector<1xf32> to vector<1x1xf32>
    %cst_42 = arith.constant 6.000000e+00 : f32
    %84 = vector.broadcast %cst_42 : f32 to vector<1x1xf32>
    %85 = arith.divf %83, %84 : vector<1x1xf32>
    %86 = vector.broadcast %85 : vector<1x1xf32> to vector<1x6xf32>
    %87 = arith.subf %75, %86 : vector<1x6xf32>
    %88 = vector.broadcast %81 : vector<1x1xf32> to vector<1x6xf32>
    %89 = arith.addf %88, %87 : vector<1x6xf32>
    %c0_43 = arith.constant 0 : index
    %c0_44 = arith.constant 0 : index
    %c0_45 = arith.constant 0 : index
    %90 = vector.load %arg16[%c0_43, %c0_44, %c0_45] : memref<1x1x6xf32, #tpu.memory_space<vmem>>, vector<1x1x6xf32>
    %91 = vector.shape_cast %90 : vector<1x1x6xf32> to vector<1x6xf32>
    %92 = vector.shape_cast %89 : vector<1x6xf32> to vector<1x1x6xf32>
    tpu.vector_store %arg16[%c0_43, %c0_44, %c0_45], %92 {strides = array<i32>} : memref<1x1x6xf32, #tpu.memory_space<vmem>>, vector<1x1x6xf32>,
    return
  }
  func.func @transform_0(%arg0: i32) -> (i32, i32, i32) {
    %c0_i32 = arith.constant 0 : i32
    %c0_i32_0 = arith.constant 0 : i32
    %c0_i32_1 = arith.constant 0 : i32
    return %arg0, %c0_i32, %c0_i32_0 : i32, i32, i32
  }
  func.func @transform_1(%arg0: i32) -> (i32, i32) {
    %c0_i32 = arith.constant 0 : i32
    %c0_i32_0 = arith.constant 0 : i32
    %c0_i32_1 = arith.constant 0 : i32
    return %c0_i32, %c0_i32_0 : i32, i32
  }
  func.func @transform_2(%arg0: i32) -> (i32, i32) {
    %c0_i32 = arith.constant 0 : i32
    %c0_i32_0 = arith.constant 0 : i32
    %c0_i32_1 = arith.constant 0 : i32
    return %c0_i32, %c0_i32_0 : i32, i32
  }
  func.func @transform_3(%arg0: i32) -> (i32, i32) {
    %c0_i32 = arith.constant 0 : i32
    %c0_i32_0 = arith.constant 0 : i32
    %c0_i32_1 = arith.constant 0 : i32
    return %c0_i32, %c0_i32_0 : i32, i32
  }
  func.func @transform_4(%arg0: i32) -> (i32, i32) {
    %c0_i32 = arith.constant 0 : i32
    %c0_i32_0 = arith.constant 0 : i32
    %c0_i32_1 = arith.constant 0 : i32
    return %c0_i32, %c0_i32_0 : i32, i32
  }
  func.func @transform_5(%arg0: i32) -> (i32, i32) {
    %c0_i32 = arith.constant 0 : i32
    %c0_i32_0 = arith.constant 0 : i32
    %c0_i32_1 = arith.constant 0 : i32
    return %c0_i32, %c0_i32_0 : i32, i32
  }
  func.func @transform_6(%arg0: i32) -> (i32, i32) {
    %c0_i32 = arith.constant 0 : i32
    %c0_i32_0 = arith.constant 0 : i32
    %c0_i32_1 = arith.constant 0 : i32
    return %c0_i32, %c0_i32_0 : i32, i32
  }
  func.func @transform_7(%arg0: i32) -> (i32, i32) {
    %c0_i32 = arith.constant 0 : i32
    %c0_i32_0 = arith.constant 0 : i32
    %c0_i32_1 = arith.constant 0 : i32
    return %c0_i32, %c0_i32_0 : i32, i32
  }
  func.func @transform_8(%arg0: i32) -> (i32, i32) {
    %c0_i32 = arith.constant 0 : i32
    %c0_i32_0 = arith.constant 0 : i32
    %c0_i32_1 = arith.constant 0 : i32
    return %c0_i32, %c0_i32_0 : i32, i32
  }
  func.func @transform_9(%arg0: i32) -> (i32, i32) {
    %c0_i32 = arith.constant 0 : i32
    %c0_i32_0 = arith.constant 0 : i32
    %c0_i32_1 = arith.constant 0 : i32
    return %c0_i32, %c0_i32_0 : i32, i32
  }
  func.func @transform_10(%arg0: i32) -> (i32, i32) {
    %c0_i32 = arith.constant 0 : i32
    %c0_i32_0 = arith.constant 0 : i32
    %c0_i32_1 = arith.constant 0 : i32
    return %c0_i32, %c0_i32_0 : i32, i32
  }
  func.func @transform_11(%arg0: i32) -> (i32, i32) {
    %c0_i32 = arith.constant 0 : i32
    %c0_i32_0 = arith.constant 0 : i32
    %c0_i32_1 = arith.constant 0 : i32
    return %c0_i32, %c0_i32_0 : i32, i32
  }
  func.func @transform_12(%arg0: i32) -> (i32, i32) {
    %c0_i32 = arith.constant 0 : i32
    %c0_i32_0 = arith.constant 0 : i32
    %c0_i32_1 = arith.constant 0 : i32
    return %c0_i32, %c0_i32_0 : i32, i32
  }
  func.func @transform_13(%arg0: i32) -> (i32, i32) {
    %c0_i32 = arith.constant 0 : i32
    %c0_i32_0 = arith.constant 0 : i32
    %c0_i32_1 = arith.constant 0 : i32
    return %c0_i32, %c0_i32_0 : i32, i32
  }
  func.func @transform_14(%arg0: i32) -> (i32, i32) {
    %c0_i32 = arith.constant 0 : i32
    %c0_i32_0 = arith.constant 0 : i32
    %c0_i32_1 = arith.constant 0 : i32
    return %c0_i32, %c0_i32_0 : i32, i32
  }
  func.func @transform_15(%arg0: i32) -> (i32, i32, i32) {
    %c0_i32 = arith.constant 0 : i32
    %c0_i32_0 = arith.constant 0 : i32
    %c0_i32_1 = arith.constant 0 : i32
    return %arg0, %c0_i32, %c0_i32_0 : i32, i32, i32
  }
}

</mosaic_0001>

<llo_original>
// kernel: dueling_dqn_forward.1
$region0: #{dueling_dqn_forward.1}
  #allocation0 [shape = 'u32[]', space=smem, size = 0x4, offset = 0x4, fixed_abs, tag = 'smem constant byte address 0x4 - core index']
  #allocation1 [shape = 'u32[144,128]{1,0:T(1,128)}', space=vmem, size = 0x12000, scoped, tag = 'internal scratch']
  #allocation2 [shape = 'f32[1,1]{1,0:T(1,128)S(1)}', space=vmem, size = 0x200, scoped, tag = 'scoped memory for dueling_dqn_forward.1']
  %s0 = inlined_call_operand.vmem [shape: bf16[2,100,256], index: 0, kind: input, shape index: {}]
  %s1 = inlined_call_operand.vmem [shape: bf16[256,32], index: 1, kind: input, shape index: {}]
  %s2 = inlined_call_operand.vmem [shape: f32[1,32], index: 2, kind: input, shape index: {}]
  %s3 = inlined_call_operand.vmem [shape: bf16[256,100], index: 3, kind: input, shape index: {}]
  %s4 = inlined_call_operand.vmem [shape: bf16[512,64], index: 4, kind: input, shape index: {}]
  %s5 = inlined_call_operand.vmem [shape: f32[1,64], index: 5, kind: input, shape index: {}]
  %s6 = inlined_call_operand.vmem [shape: bf16[36,16], index: 6, kind: input, shape index: {}]
  %s7 = inlined_call_operand.vmem [shape: bf16[576,64], index: 7, kind: input, shape index: {}]
  %s8 = inlined_call_operand.vmem [shape: f32[1,64], index: 8, kind: input, shape index: {}]
  %s9 = inlined_call_operand.vmem [shape: bf16[256,512], index: 9, kind: input, shape index: {}]
  %s10 = inlined_call_operand.vmem [shape: f32[1,512], index: 10, kind: input, shape index: {}]
  %s11 = inlined_call_operand.vmem [shape: bf16[256,6], index: 11, kind: input, shape index: {}]
  %s12 = inlined_call_operand.vmem [shape: f32[1,6], index: 12, kind: input, shape index: {}]
  %s13 = inlined_call_operand.vmem [shape: bf16[256,1], index: 13, kind: input, shape index: {}]
  %s14 = inlined_call_operand.<no memory space> [shape: f32[1,1], index: 14, kind: input, shape index: {}]
  %s15 = inlined_call_operand.hbm [shape: f32[2,1,6], index: 15, kind: output, shape index: {}]
  %s16 = sld [smem:[#allocation0]]
  $region93: #{dueling_dqn_forward.1} parent=0
    _
  %s18 = ssub.s32 1, %s16
  %s19 = scalar_select 0, %s18, %s16
  %v20 = vstv %s14
  %21 = vst [vmem:[#allocation2] sm:$0x1] %v20
  $region1: #{dueling_dqn_forward.1} parent=0
    #allocation3 [shape = 'u8[1024]{0}', space=vmem, size = 0x400, scoped, tag = 'output window, operand 0']
    #allocation4 [shape = 's32[2]{0}', space=sflag, size = 0x8, scoped, tag = 'scoped memory for dueling_dqn_forward.1']
    %22 = vsyncpa [#allocation4], 0
    %s23 = scalar_lea.sflag [#allocation4], 1
    %24 = vsyncpa %s23, 0
    loop: start=0, step=1, limit=4
    $region2: #{dueling_dqn_forward.1} parent=1 // loop_pre_header
      _
    $region3: #{dueling_dqn_forward.1} parent=1 // loop_header
      %s26 = sphi 0, %s30
      %p27 = scmp.ge.s32.totalorder %s26, 4
      %s36 = sphi 0, %s38
      %s39 = sphi 0, %s36
      %s40 = sphi 0, %s39
      %s56 = sphi 0, %s40
      %s60 = sphi 0, %s60
      %s62 = sphi 0, %s60
      %s63 = sphi 0, %s62
      %s77 = sphi 0, %s63
      %s81 = sphi 0, %s81
      %s83 = sphi 0, %s81
      %s84 = sphi 0, %s83
      %s98 = sphi 0, %s84
      %s102 = sphi 0, %s102
      %s104 = sphi 0, %s102
      %s105 = sphi 0, %s104
      %s119 = sphi 0, %s105
      %s123 = sphi 0, %s123
      %s125 = sphi 0, %s123
      %s126 = sphi 0, %s125
      %s140 = sphi 0, %s126
      %s144 = sphi 0, %s144
      %s146 = sphi 0, %s144
      %s147 = sphi 0, %s146
      %s161 = sphi 0, %s147
      %s165 = sphi 0, %s165
      %s167 = sphi 0, %s165
      %s168 = sphi 0, %s167
      %s182 = sphi 0, %s168
      %s186 = sphi 0, %s186
      %s188 = sphi 0, %s186
      %s189 = sphi 0, %s188
      %s203 = sphi 0, %s189
      %s207 = sphi 0, %s207
      %s209 = sphi 0, %s207
      %s210 = sphi 0, %s209
      %s224 = sphi 0, %s210
      %s228 = sphi 0, %s228
      %s230 = sphi 0, %s228
      %s231 = sphi 0, %s230
      %s245 = sphi 0, %s231
      %s249 = sphi 0, %s249
      %s251 = sphi 0, %s249
      %s252 = sphi 0, %s251
      %s266 = sphi 0, %s252
      %s270 = sphi 0, %s270
      %s272 = sphi 0, %s270
      %s273 = sphi 0, %s272
      %s287 = sphi 0, %s273
      %s291 = sphi 0, %s291
      %s293 = sphi 0, %s291
      %s294 = sphi 0, %s293
      %s308 = sphi 0, %s294
      %s312 = sphi 0, %s312
      %s314 = sphi 0, %s312
      %s315 = sphi 0, %s314
      %s329 = sphi 0, %s315
      %s333 = sphi 0, %s333
      %s335 = sphi 0, %s333
      %s336 = sphi 0, %s335
      %s350 = sphi 0, %s336
      %s356 = sphi 0, %s358
      %s359 = sphi 0, %s356
      %s360 = sphi 0, %s359
      %s376 = sphi 0, %s360
    $region4: #{dueling_dqn_forward.1} parent=1 // loop_header_branch
      %29 = sbr.rel (%p27) target = $region8
    $region5: #{dueling_dqn_forward.1} parent=1 // loop_body
      %s31 = ssub.s32 %s26, 1
      %s32 = ssub.s32 %s26, 2
      %s33 = sadd.s32 %s26, 1
      %s34 = ssub.s32 %s26, %s33
      %p35 = scmp.eq.s32.totalorder %s34, 0
      %s37 = sadd.s32 %s36, 1
      %s38 = scalar_select %p35, %s36, %s37
      %p41 = pneg %p35
      %p42 = scmp.eq.s32.totalorder %s26, 1
      %p43 = por %p41, %p42
      %p44 = scmp.ne.s32.totalorder %s36, %s39
      %p45 = scmp.eq.s32.totalorder %s26, 0
      %p46 = por %p44, %p45
      %p47 = scmp.ne.s32.totalorder %s36, %s39
      %p48 = scmp.eq.s32.totalorder %s31, 1
      %p49 = por %p47, %p48
      %p50 = scmp.ne.s32.totalorder %s39, %s40
      %p51 = scmp.eq.s32.totalorder %s31, 0
      %p52 = por %p50, %p51
      %p53 = scmp.ne.s32.totalorder %s39, %s40
      %p54 = scmp.eq.s32.totalorder %s32, 1
      %p55 = por %p53, %p54
      %p57 = scmp.ne.s32.totalorder %s40, %s56
      %p58 = scmp.eq.s32.totalorder %s32, 0
      %p59 = por %p57, %p58
      %s61 = sadd.s32 %s60, 1
      %p64 = scmp.eq.s32.totalorder %s26, 1
      %p65 = scmp.ne.s32.totalorder %s60, %s62
      %p66 = scmp.eq.s32.totalorder %s26, 0
      %p67 = por %p65, %p66
      %p68 = scmp.ne.s32.totalorder %s60, %s62
      %p69 = scmp.eq.s32.totalorder %s31, 1
      %p70 = por %p68, %p69
      %p71 = scmp.ne.s32.totalorder %s62, %s63
      %p72 = scmp.eq.s32.totalorder %s31, 0
      %p73 = por %p71, %p72
      %p74 = scmp.ne.s32.totalorder %s62, %s63
      %p75 = scmp.eq.s32.totalorder %s32, 1
      %p76 = por %p74, %p75
      %p78 = scmp.ne.s32.totalorder %s63, %s77
      %p79 = scmp.eq.s32.totalorder %s32, 0
      %p80 = por %p78, %p79
      %s82 = sadd.s32 %s81, 1
      %p85 = scmp.eq.s32.totalorder %s26, 1
      %p86 = scmp.ne.s32.totalorder %s81, %s83
      %p87 = scmp.eq.s32.totalorder %s26, 0
      %p88 = por %p86, %p87
      %p89 = scmp.ne.s32.totalorder %s81, %s83
      %p90 = scmp.eq.s32.totalorder %s31, 1
      %p91 = por %p89, %p90
      %p92 = scmp.ne.s32.totalorder %s83, %s84
      %p93 = scmp.eq.s32.totalorder %s31, 0
      %p94 = por %p92, %p93
      %p95 = scmp.ne.s32.totalorder %s83, %s84
      %p96 = scmp.eq.s32.totalorder %s32, 1
      %p97 = por %p95, %p96
      %p99 = scmp.ne.s32.totalorder %s84, %s98
      %p100 = scmp.eq.s32.totalorder %s32, 0
      %p101 = por %p99, %p100
      %s103 = sadd.s32 %s102, 1
      %p106 = scmp.eq.s32.totalorder %s26, 1
      %p107 = scmp.ne.s32.totalorder %s102, %s104
      %p108 = scmp.eq.s32.totalorder %s26, 0
      %p109 = por %p107, %p108
      %p110 = scmp.ne.s32.totalorder %s102, %s104
      %p111 = scmp.eq.s32.totalorder %s31, 1
      %p112 = por %p110, %p111
      %p113 = scmp.ne.s32.totalorder %s104, %s105
      %p114 = scmp.eq.s32.totalorder %s31, 0
      %p115 = por %p113, %p114
      %p116 = scmp.ne.s32.totalorder %s104, %s105
      %p117 = scmp.eq.s32.totalorder %s32, 1
      %p118 = por %p116, %p117
      %p120 = scmp.ne.s32.totalorder %s105, %s119
      %p121 = scmp.eq.s32.totalorder %s32, 0
      %p122 = por %p120, %p121
      %s124 = sadd.s32 %s123, 1
      %p127 = scmp.eq.s32.totalorder %s26, 1
      %p128 = scmp.ne.s32.totalorder %s123, %s125
      %p129 = scmp.eq.s32.totalorder %s26, 0
      %p130 = por %p128, %p129
      %p131 = scmp.ne.s32.totalorder %s123, %s125
      %p132 = scmp.eq.s32.totalorder %s31, 1
      %p133 = por %p131, %p132
      %p134 = scmp.ne.s32.totalorder %s125, %s126
      %p135 = scmp.eq.s32.totalorder %s31, 0
      %p136 = por %p134, %p135
      %p137 = scmp.ne.s32.totalorder %s125, %s126
      %p138 = scmp.eq.s32.totalorder %s32, 1
      %p139 = por %p137, %p138
      %p141 = scmp.ne.s32.totalorder %s126, %s140
      %p142 = scmp.eq.s32.totalorder %s32, 0
      %p143 = por %p141, %p142
      %s145 = sadd.s32 %s144, 1
      %p148 = scmp.eq.s32.totalorder %s26, 1
      %p149 = scmp.ne.s32.totalorder %s144, %s146
      %p150 = scmp.eq.s32.totalorder %s26, 0
      %p151 = por %p149, %p150
      %p152 = scmp.ne.s32.totalorder %s144, %s146
      %p153 = scmp.eq.s32.totalorder %s31, 1
      %p154 = por %p152, %p153
      %p155 = scmp.ne.s32.totalorder %s146, %s147
      %p156 = scmp.eq.s32.totalorder %s31, 0
      %p157 = por %p155, %p156
      %p158 = scmp.ne.s32.totalorder %s146, %s147
      %p159 = scmp.eq.s32.totalorder %s32, 1
      %p160 = por %p158, %p159
      %p162 = scmp.ne.s32.totalorder %s147, %s161
      %p163 = scmp.eq.s32.totalorder %s32, 0
      %p164 = por %p162, %p163
      %s166 = sadd.s32 %s165, 1
      %p169 = scmp.eq.s32.totalorder %s26, 1
      %p170 = scmp.ne.s32.totalorder %s165, %s167
      %p171 = scmp.eq.s32.totalorder %s26, 0
      %p172 = por %p170, %p171
      %p173 = scmp.ne.s32.totalorder %s165, %s167
      %p174 = scmp.eq.s32.totalorder %s31, 1
      %p175 = por %p173, %p174
      %p176 = scmp.ne.s32.totalorder %s167, %s168
      %p177 = scmp.eq.s32.totalorder %s31, 0
      %p178 = por %p176, %p177
      %p179 = scmp.ne.s32.totalorder %s167, %s168
      %p180 = scmp.eq.s32.totalorder %s32, 1
      %p181 = por %p179, %p180
      %p183 = scmp.ne.s32.totalorder %s168, %s182
      %p184 = scmp.eq.s32.totalorder %s32, 0
      %p185 = por %p183, %p184
      %s187 = sadd.s32 %s186, 1
      %p190 = scmp.eq.s32.totalorder %s26, 1
      %p191 = scmp.ne.s32.totalorder %s186, %s188
      %p192 = scmp.eq.s32.totalorder %s26, 0
      %p193 = por %p191, %p192
      %p194 = scmp.ne.s32.totalorder %s186, %s188
      %p195 = scmp.eq.s32.totalorder %s31, 1
      %p196 = por %p194, %p195
      %p197 = scmp.ne.s32.totalorder %s188, %s189
      %p198 = scmp.eq.s32.totalorder %s31, 0
      %p199 = por %p197, %p198
      %p200 = scmp.ne.s32.totalorder %s188, %s189
      %p201 = scmp.eq.s32.totalorder %s32, 1
      %p202 = por %p200, %p201
      %p204 = scmp.ne.s32.totalorder %s189, %s203
      %p205 = scmp.eq.s32.totalorder %s32, 0
      %p206 = por %p204, %p205
      %s208 = sadd.s32 %s207, 1
      %p211 = scmp.eq.s32.totalorder %s26, 1
      %p212 = scmp.ne.s32.totalorder %s207, %s209
      %p213 = scmp.eq.s32.totalorder %s26, 0
      %p214 = por %p212, %p213
      %p215 = scmp.ne.s32.totalorder %s207, %s209
      %p216 = scmp.eq.s32.totalorder %s31, 1
      %p217 = por %p215, %p216
      %p218 = scmp.ne.s32.totalorder %s209, %s210
      %p219 = scmp.eq.s32.totalorder %s31, 0
      %p220 = por %p218, %p219
      %p221 = scmp.ne.s32.totalorder %s209, %s210
      %p222 = scmp.eq.s32.totalorder %s32, 1
      %p223 = por %p221, %p222
      %p225 = scmp.ne.s32.totalorder %s210, %s224
      %p226 = scmp.eq.s32.totalorder %s32, 0
      %p227 = por %p225, %p226
      %s229 = sadd.s32 %s228, 1
      %p232 = scmp.eq.s32.totalorder %s26, 1
      %p233 = scmp.ne.s32.totalorder %s228, %s230
      %p234 = scmp.eq.s32.totalorder %s26, 0
      %p235 = por %p233, %p234
      %p236 = scmp.ne.s32.totalorder %s228, %s230
      %p237 = scmp.eq.s32.totalorder %s31, 1
      %p238 = por %p236, %p237
      %p239 = scmp.ne.s32.totalorder %s230, %s231
      %p240 = scmp.eq.s32.totalorder %s31, 0
      %p241 = por %p239, %p240
      %p242 = scmp.ne.s32.totalorder %s230, %s231
      %p243 = scmp.eq.s32.totalorder %s32, 1
      %p244 = por %p242, %p243
      %p246 = scmp.ne.s32.totalorder %s231, %s245
      %p247 = scmp.eq.s32.totalorder %s32, 0
      %p248 = por %p246, %p247
      %s250 = sadd.s32 %s249, 1
      %p253 = scmp.eq.s32.totalorder %s26, 1
      %p254 = scmp.ne.s32.totalorder %s249, %s251
      %p255 = scmp.eq.s32.totalorder %s26, 0
      %p256 = por %p254, %p255
      %p257 = scmp.ne.s32.totalorder %s249, %s251
      %p258 = scmp.eq.s32.totalorder %s31, 1
      %p259 = por %p257, %p258
      %p260 = scmp.ne.s32.totalorder %s251, %s252
      %p261 = scmp.eq.s32.totalorder %s31, 0
      %p262 = por %p260, %p261
      %p263 = scmp.ne.s32.totalorder %s251, %s252
      %p264 = scmp.eq.s32.totalorder %s32, 1
      %p265 = por %p263, %p264
      %p267 = scmp.ne.s32.totalorder %s252, %s266
      %p268 = scmp.eq.s32.totalorder %s32, 0
      %p269 = por %p267, %p268
      %s271 = sadd.s32 %s270, 1
      %p274 = scmp.eq.s32.totalorder %s26, 1
      %p275 = scmp.ne.s32.totalorder %s270, %s272
      %p276 = scmp.eq.s32.totalorder %s26, 0
      %p277 = por %p275, %p276
      %p278 = scmp.ne.s32.totalorder %s270, %s272
      %p279 = scmp.eq.s32.totalorder %s31, 1
      %p280 = por %p278, %p279
      %p281 = scmp.ne.s32.totalorder %s272, %s273
      %p282 = scmp.eq.s32.totalorder %s31, 0
      %p283 = por %p281, %p282
      %p284 = scmp.ne.s32.totalorder %s272, %s273
      %p285 = scmp.eq.s32.totalorder %s32, 1
      %p286 = por %p284, %p285
      %p288 = scmp.ne.s32.totalorder %s273, %s287
      %p289 = scmp.eq.s32.totalorder %s32, 0
      %p290 = por %p288, %p289
      %s292 = sadd.s32 %s291, 1
      %p295 = scmp.eq.s32.totalorder %s26, 1
      %p296 = scmp.ne.s32.totalorder %s291, %s293
      %p297 = scmp.eq.s32.totalorder %s26, 0
      %p298 = por %p296, %p297
      %p299 = scmp.ne.s32.totalorder %s291, %s293
      %p300 = scmp.eq.s32.totalorder %s31, 1
      %p301 = por %p299, %p300
      %p302 = scmp.ne.s32.totalorder %s293, %s294
      %p303 = scmp.eq.s32.totalorder %s31, 0
      %p304 = por %p302, %p303
      %p305 = scmp.ne.s32.totalorder %s293, %s294
      %p306 = scmp.eq.s32.totalorder %s32, 1
      %p307 = por %p305, %p306
      %p309 = scmp.ne.s32.totalorder %s294, %s308
      %p310 = scmp.eq.s32.totalorder %s32, 0
      %p311 = por %p309, %p310
      %s313 = sadd.s32 %s312, 1
      %p316 = scmp.eq.s32.totalorder %s26, 1
      %p317 = scmp.ne.s32.totalorder %s312, %s314
      %p318 = scmp.eq.s32.totalorder %s26, 0
      %p319 = por %p317, %p318
      %p320 = scmp.ne.s32.totalorder %s312, %s314
      %p321 = scmp.eq.s32.totalorder %s31, 1
      %p322 = por %p320, %p321
      %p323 = scmp.ne.s32.totalorder %s314, %s315
      %p324 = scmp.eq.s32.totalorder %s31, 0
      %p325 = por %p323, %p324
      %p326 = scmp.ne.s32.totalorder %s314, %s315
      %p327 = scmp.eq.s32.totalorder %s32, 1
      %p328 = por %p326, %p327
      %p330 = scmp.ne.s32.totalorder %s315, %s329
      %p331 = scmp.eq.s32.totalorder %s32, 0
      %p332 = por %p330, %p331
      %s334 = sadd.s32 %s333, 1
      %p337 = scmp.eq.s32.totalorder %s26, 1
      %p338 = scmp.ne.s32.totalorder %s333, %s335
      %p339 = scmp.eq.s32.totalorder %s26, 0
      %p340 = por %p338, %p339
      %p341 = scmp.ne.s32.totalorder %s333, %s335
      %p342 = scmp.eq.s32.totalorder %s31, 1
      %p343 = por %p341, %p342
      %p344 = scmp.ne.s32.totalorder %s335, %s336
      %p345 = scmp.eq.s32.totalorder %s31, 0
      %p346 = por %p344, %p345
      %p347 = scmp.ne.s32.totalorder %s335, %s336
      %p348 = scmp.eq.s32.totalorder %s32, 1
      %p349 = por %p347, %p348
      %p351 = scmp.ne.s32.totalorder %s336, %s350
      %p352 = scmp.eq.s32.totalorder %s32, 0
      %p353 = por %p351, %p352
      %s354 = ssub.s32 %s26, %s33
      %p355 = scmp.eq.s32.totalorder %s354, 0
      %s357 = sadd.s32 %s356, 1
      %s358 = scalar_select %p355, %s356, %s357
      %p361 = pneg %p355
      %p362 = scmp.eq.s32.totalorder %s26, 1
      %p363 = por %p361, %p362
      %p364 = scmp.ne.s32.totalorder %s356, %s359
      %p365 = scmp.eq.s32.totalorder %s26, 0
      %p366 = por %p364, %p365
      %p367 = scmp.ne.s32.totalorder %s356, %s359
      %p368 = scmp.eq.s32.totalorder %s31, 1
      %p369 = por %p367, %p368
      %p370 = scmp.ne.s32.totalorder %s359, %s360
      %p371 = scmp.eq.s32.totalorder %s31, 0
      %p372 = por %p370, %p371
      %p373 = scmp.ne.s32.totalorder %s359, %s360
      %p374 = scmp.eq.s32.totalorder %s32, 1
      %p375 = por %p373, %p374
      %p377 = scmp.ne.s32.totalorder %s360, %s376
      %p378 = scmp.eq.s32.totalorder %s32, 0
      %p379 = por %p377, %p378
      %p380 = scmp.le.s32.totalorder 1, %s26
      %p381 = scmp.lt.s32.totalorder %s26, 3
      %p382 = pnand %p380, %p381
      %p383 = pneg %p382
      // Predicated region
      $region9: #{dueling_dqn_forward.1} parent=5 // pred_check
        _
      $region10: #{dueling_dqn_forward.1} parent=5 // pred_check_branch
        %385 = sbr.rel (%p382) target = $region12
      $region11: #{dueling_dqn_forward.1} parent=5 // pred_region
        %s386 = ssub.s32 %s26, 1
        // Predicated region
        $region13: #{dueling_dqn_forward.1} parent=11 // pred_check
          %p387 = pneg %p73
        $region14: #{dueling_dqn_forward.1} parent=11 // pred_check_branch
          %389 = sbr.rel (%p387) target = $region16
        $region15: #{dueling_dqn_forward.1} parent=11 // pred_region
          _
        $region16: #{dueling_dqn_forward.1} parent=11 // pred_fallthru
          _
        // Predicated region
        $region17: #{dueling_dqn_forward.1} parent=11 // pred_check
          %p390 = pneg %p94
        $region18: #{dueling_dqn_forward.1} parent=11 // pred_check_branch
          %392 = sbr.rel (%p390) target = $region20
        $region19: #{dueling_dqn_forward.1} parent=11 // pred_region
          _
        $region20: #{dueling_dqn_forward.1} parent=11 // pred_fallthru
          _
        // Predicated region
        $region21: #{dueling_dqn_forward.1} parent=11 // pred_check
          %p393 = pneg %p115
        $region22: #{dueling_dqn_forward.1} parent=11 // pred_check_branch
          %395 = sbr.rel (%p393) target = $region24
        $region23: #{dueling_dqn_forward.1} parent=11 // pred_region
          _
        $region24: #{dueling_dqn_forward.1} parent=11 // pred_fallthru
          _
        // Predicated region
        $region25: #{dueling_dqn_forward.1} parent=11 // pred_check
          %p396 = pneg %p136
        $region26: #{dueling_dqn_forward.1} parent=11 // pred_check_branch
          %398 = sbr.rel (%p396) target = $region28
        $region27: #{dueling_dqn_forward.1} parent=11 // pred_region
          _
        $region28: #{dueling_dqn_forward.1} parent=11 // pred_fallthru
          _
        // Predicated region
        $region29: #{dueling_dqn_forward.1} parent=11 // pred_check
          %p399 = pneg %p157
        $region30: #{dueling_dqn_forward.1} parent=11 // pred_check_branch
          %401 = sbr.rel (%p399) target = $region32
        $region31: #{dueling_dqn_forward.1} parent=11 // pred_region
          _
        $region32: #{dueling_dqn_forward.1} parent=11 // pred_fallthru
          _
        // Predicated region
        $region33: #{dueling_dqn_forward.1} parent=11 // pred_check
          %p402 = pneg %p178
        $region34: #{dueling_dqn_forward.1} parent=11 // pred_check_branch
          %404 = sbr.rel (%p402) target = $region36
        $region35: #{dueling_dqn_forward.1} parent=11 // pred_region
          _
        $region36: #{dueling_dqn_forward.1} parent=11 // pred_fallthru
          _
        // Predicated region
        $region37: #{dueling_dqn_forward.1} parent=11 // pred_check
          %p405 = pneg %p199
        $region38: #{dueling_dqn_forward.1} parent=11 // pred_check_branch
          %407 = sbr.rel (%p405) target = $region40
        $region39: #{dueling_dqn_forward.1} parent=11 // pred_region
          _
        $region40: #{dueling_dqn_forward.1} parent=11 // pred_fallthru
          _
        // Predicated region
        $region41: #{dueling_dqn_forward.1} parent=11 // pred_check
          %p408 = pneg %p220
        $region42: #{dueling_dqn_forward.1} parent=11 // pred_check_branch
          %410 = sbr.rel (%p408) target = $region44
        $region43: #{dueling_dqn_forward.1} parent=11 // pred_region
          _
        $region44: #{dueling_dqn_forward.1} parent=11 // pred_fallthru
          _
        // Predicated region
        $region45: #{dueling_dqn_forward.1} parent=11 // pred_check
          %p411 = pneg %p241
        $region46: #{dueling_dqn_forward.1} parent=11 // pred_check_branch
          %413 = sbr.rel (%p411) target = $region48
        $region47: #{dueling_dqn_forward.1} parent=11 // pred_region
          _
        $region48: #{dueling_dqn_forward.1} parent=11 // pred_fallthru
          _
        // Predicated region
        $region49: #{dueling_dqn_forward.1} parent=11 // pred_check
          %p414 = pneg %p262
        $region50: #{dueling_dqn_forward.1} parent=11 // pred_check_branch
          %416 = sbr.rel (%p414) target = $region52
        $region51: #{dueling_dqn_forward.1} parent=11 // pred_region
          _
        $region52: #{dueling_dqn_forward.1} parent=11 // pred_fallthru
          _
        // Predicated region
        $region53: #{dueling_dqn_forward.1} parent=11 // pred_check
          %p417 = pneg %p283
        $region54: #{dueling_dqn_forward.1} parent=11 // pred_check_branch
          %419 = sbr.rel (%p417) target = $region56
        $region55: #{dueling_dqn_forward.1} parent=11 // pred_region
          _
        $region56: #{dueling_dqn_forward.1} parent=11 // pred_fallthru
          _
        // Predicated region
        $region57: #{dueling_dqn_forward.1} parent=11 // pred_check
          %p420 = pneg %p304
        $region58: #{dueling_dqn_forward.1} parent=11 // pred_check_branch
          %422 = sbr.rel (%p420) target = $region60
        $region59: #{dueling_dqn_forward.1} parent=11 // pred_region
          _
        $region60: #{dueling_dqn_forward.1} parent=11 // pred_fallthru
          _
        // Predicated region
        $region61: #{dueling_dqn_forward.1} parent=11 // pred_check
          %p423 = pneg %p325
        $region62: #{dueling_dqn_forward.1} parent=11 // pred_check_branch
          %425 = sbr.rel (%p423) target = $region64
        $region63: #{dueling_dqn_forward.1} parent=11 // pred_region
          _
        $region64: #{dueling_dqn_forward.1} parent=11 // pred_fallthru
          _
        // Predicated region
        $region65: #{dueling_dqn_forward.1} parent=11 // pred_check
          %p426 = pneg %p346
        $region66: #{dueling_dqn_forward.1} parent=11 // pred_check_branch
          %428 = sbr.rel (%p426) target = $region68
        $region67: #{dueling_dqn_forward.1} parent=11 // pred_region
          _
        $region68: #{dueling_dqn_forward.1} parent=11 // pred_fallthru
          _
      $region12: #{dueling_dqn_forward.1} parent=5 // pred_fallthru
        _
      %p429 = scmp.lt.s32.totalorder %s26, 2
      // Predicated region
      $region69: #{dueling_dqn_forward.1} parent=5 // pred_check
        %p430 = pneg %p429
      $region70: #{dueling_dqn_forward.1} parent=5 // pred_check_branch
        %432 = sbr.rel (%p430) target = $region72
      $region71: #{dueling_dqn_forward.1} parent=5 // pred_region
        // Predicated region
        $region73: #{dueling_dqn_forward.1} parent=71 // pred_check
          %p433 = pneg %p46
        $region74: #{dueling_dqn_forward.1} parent=71 // pred_check_branch
          %435 = sbr.rel (%p433) target = $region76
        $region75: #{dueling_dqn_forward.1} parent=71 // pred_region
          %p436 = scmp.lt.s32.totalorder %s26, 1
          %s437 = scalar_select %p436, %s26, 1
          %s438 = smul.addr %s437, 26
          %s439 = smul.addr %s438, 4
          %s440 = scalar_lea.vmem %s0, %s439
        $region76: #{dueling_dqn_forward.1} parent=71 // pred_fallthru
          _
      $region72: #{dueling_dqn_forward.1} parent=5 // pred_fallthru
        _
      %p441 = scmp.le.s32.totalorder 1, %s26
      %p442 = scmp.lt.s32.totalorder %s26, 3
      %p443 = pnand %p441, %p442
      %p444 = pneg %p443
      // Predicated region
      $region77: #{dueling_dqn_forward.1} parent=5 // pred_check
        _
      $region78: #{dueling_dqn_forward.1} parent=5 // pred_check_branch
        %446 = sbr.rel (%p443) target = $region80
      $region79: #{dueling_dqn_forward.1} parent=5 // pred_region
        %s447 = ssub.s32 %s26, 1
        %p448 = scmp.lt.s32.totalorder %s31, 1
        %s449 = scalar_select %p448, %s31, 1
        %s450 = smul.addr %s449, 26
        %s451 = smul.addr %s450, 4
        %s452 = scalar_lea.vmem %s0, %s451
        %p453 = pneg %p52
        %p454 = pneg %p49
        %p455 = pneg %p73
        %p456 = pneg %p70
        %p457 = pneg %p94
        %p458 = pneg %p91
        %p459 = pneg %p115
        %p460 = pneg %p112
        %p461 = pneg %p136
        %p462 = pneg %p133
        %p463 = pneg %p157
        %p464 = pneg %p154
        %p465 = pneg %p178
        %p466 = pneg %p175
        %p467 = pneg %p199
        %p468 = pneg %p196
        %p469 = pneg %p220
        %p470 = pneg %p217
        %p471 = pneg %p241
        %p472 = pneg %p238
        %p473 = pneg %p262
        %p474 = pneg %p259
        %p475 = pneg %p283
        %p476 = pneg %p280
        %p477 = pneg %p304
        %p478 = pneg %p301
        %p479 = pneg %p325
        %p480 = pneg %p322
        %p481 = pneg %p346
        %p482 = pneg %p343
        %p483 = pneg %p372
        %p484 = pneg %p369
        %s485 = sand.u32 %s359, 1
        %s486 = scalar_lea.sflag [#allocation4], %s485
        %s487 = sand.u32 %s359, 1
        %s488 = scalar_lea.vmem [#allocation3], %s487
        %p489 = scmp.lt.s32.totalorder %s31, 1
        %s490 = scalar_select %p489, %s31, 1
        %s491 = smul.addr %s490, 26
        %s492 = smul.addr %s491, 4
        %s493 = scalar_lea.vmem %s0, %s492
        %v495 = vld [vmem:[%s493] sm:$0xff]
        %v496 = vld [vmem:[%s493 + $0x8] sm:$0xff]
        %v497 = vld [vmem:[%s493 + $0x10] sm:$0xff]
        %v498 = vld [vmem:[%s493 + $0x18] sm:$0xff]
        %v499 = vld [vmem:[%s493 + $0x20] sm:$0xff]
        %v500 = vld [vmem:[%s493 + $0x28] sm:$0xff]
        %v501 = vld [vmem:[%s493 + $0x30] sm:$0xff]
        %v502 = vld [vmem:[%s493 + $0x38] sm:$0xff]
        %v503 = vld [vmem:[%s493 + $0x40] sm:$0xff]
        %v504 = vld [vmem:[%s493 + $0x48] sm:$0xff]
        %v505 = vld [vmem:[%s493 + $0x50] sm:$0xff]
        %v506 = vld [vmem:[%s493 + $0x58] sm:$0xff]
        %v507 = vld [vmem:[%s493 + $0x60] sm:$0x33]
        %v508 = vld [vmem:[%s1] sm:$0xf]
        %v509 = vld [vmem:[%s1 + $0x4] sm:$0xf]
        %v510 = vld [vmem:[%s1 + $0x8] sm:$0xf]
        %v511 = vld [vmem:[%s1 + $0xc] sm:$0xf]
        %v512 = vld [vmem:[%s1 + $0x10] sm:$0xf]
        %v513 = vld [vmem:[%s1 + $0x14] sm:$0xf]
        %v514 = vld [vmem:[%s1 + $0x18] sm:$0xf]
        %v515 = vld [vmem:[%s1 + $0x1c] sm:$0xf]
        %v516 = vld [vmem:[%s1 + $0x20] sm:$0xf]
        %v517 = vld [vmem:[%s1 + $0x24] sm:$0xf]
        %v518 = vld [vmem:[%s1 + $0x28] sm:$0xf]
        %v519 = vld [vmem:[%s1 + $0x2c] sm:$0xf]
        %v520 = vld [vmem:[%s1 + $0x30] sm:$0xf]
        %v521 = vld [vmem:[%s1 + $0x34] sm:$0xf]
        %v522 = vld [vmem:[%s1 + $0x38] sm:$0xf]
        %v523 = vld [vmem:[%s1 + $0x3c] sm:$0xf]
        %v524 = vld [vmem:[%s1 + $0x40] sm:$0xf]
        %v525 = vld [vmem:[%s1 + $0x44] sm:$0xf]
        %v526 = vld [vmem:[%s1 + $0x48] sm:$0xf]
        %v527 = vld [vmem:[%s1 + $0x4c] sm:$0xf]
        %v528 = vld [vmem:[%s1 + $0x50] sm:$0xf]
        %v529 = vld [vmem:[%s1 + $0x54] sm:$0xf]
        %v530 = vld [vmem:[%s1 + $0x58] sm:$0xf]
        %v531 = vld [vmem:[%s1 + $0x5c] sm:$0xf]
        %v532 = vld [vmem:[%s1 + $0x60] sm:$0xf]
        %v533 = vld [vmem:[%s1 + $0x64] sm:$0xf]
        %v534 = vld [vmem:[%s1 + $0x68] sm:$0xf]
        %v535 = vld [vmem:[%s1 + $0x6c] sm:$0xf]
        %v536 = vld [vmem:[%s1 + $0x70] sm:$0xf]
        %v537 = vld [vmem:[%s1 + $0x74] sm:$0xf]
        %v538 = vld [vmem:[%s1 + $0x78] sm:$0xf]
        %v539 = vld [vmem:[%s1 + $0x7c] sm:$0xf]
        %v540 = vld [vmem:[%s2] sm:$0x1]
        %v542 = vlaneseq
        %v543 = vshrl.u32 %v542, 7
        %v544 = vsub.s32 0, %v543
        %v545 = vrot.slane %v540, %v544
        %v560 = vunpack.c.l.b16 %v495
        %v561 = vunpack.c.h.b16 %v495
        %v562 = vunpack.c.l.b16 %v496
        %v563 = vunpack.c.h.b16 %v496
        %v564 = vunpack.c.l.b16 %v497
        %v565 = vunpack.c.h.b16 %v497
        %v566 = vunpack.c.l.b16 %v498
        %v567 = vunpack.c.h.b16 %v498
        %v568 = vunpack.c.l.b16 %v499
        %v569 = vunpack.c.h.b16 %v499
        %v570 = vunpack.c.l.b16 %v500
        %v571 = vunpack.c.h.b16 %v500
        %v572 = vunpack.c.l.b16 %v501
        %v573 = vunpack.c.h.b16 %v501
        %v574 = vunpack.c.l.b16 %v502
        %v575 = vunpack.c.h.b16 %v502
        %v576 = vunpack.c.l.b16 %v503
        %v577 = vunpack.c.h.b16 %v503
        %v578 = vunpack.c.l.b16 %v504
        %v579 = vunpack.c.h.b16 %v504
        %v580 = vunpack.c.l.b16 %v505
        %v581 = vunpack.c.h.b16 %v505
        %v582 = vunpack.c.l.b16 %v506
        %v583 = vunpack.c.h.b16 %v506
        %v584 = vunpack.c.l.b16 %v507
        %v585 = vunpack.c.h.b16 %v507
        %v586 = vpack.c.b16 %v562, %v560
        %v587 = vpack.c.b16 %v563, %v561
        %v588 = vpack.c.b16 %v566, %v564
        %v589 = vpack.c.b16 %v567, %v565
        %v590 = vpack.c.b16 %v570, %v568
        %v591 = vpack.c.b16 %v571, %v569
        %v592 = vpack.c.b16 %v574, %v572
        %v593 = vpack.c.b16 %v575, %v573
        %v594 = vpack.c.b16 %v578, %v576
        %v595 = vpack.c.b16 %v579, %v577
        %v596 = vpack.c.b16 %v582, %v580
        %v597 = vpack.c.b16 %v583, %v581
        %v598 = vpack.c.b16 %v584, %v584
        %v599 = vpack.c.b16 %v585, %v585
        %v646 = vunpack.c.l.b16 %v508
        %v647 = vunpack.c.l.b16 %v509
        %v648 = vunpack.c.l.b16 %v510
        %v649 = vunpack.c.l.b16 %v511
        %v650 = vunpack.c.l.b16 %v512
        %v651 = vunpack.c.l.b16 %v513
        %v652 = vunpack.c.l.b16 %v514
        %v653 = vunpack.c.l.b16 %v515
        %v654 = vunpack.c.l.b16 %v516
        %v655 = vunpack.c.l.b16 %v517
        %v656 = vunpack.c.l.b16 %v518
        %v657 = vunpack.c.l.b16 %v519
        %v658 = vunpack.c.l.b16 %v520
        %v659 = vunpack.c.l.b16 %v521
        %v660 = vunpack.c.l.b16 %v522
        %v661 = vunpack.c.l.b16 %v523
        %v662 = vunpack.c.l.b16 %v524
        %v663 = vunpack.c.l.b16 %v525
        %v664 = vunpack.c.l.b16 %v526
        %v665 = vunpack.c.l.b16 %v527
        %v666 = vunpack.c.l.b16 %v528
        %v667 = vunpack.c.l.b16 %v529
        %v668 = vunpack.c.l.b16 %v530
        %v669 = vunpack.c.l.b16 %v531
        %v670 = vunpack.c.l.b16 %v532
        %v671 = vunpack.c.l.b16 %v533
        %v672 = vunpack.c.l.b16 %v534
        %v673 = vunpack.c.l.b16 %v535
        %v674 = vunpack.c.l.b16 %v536
        %v675 = vunpack.c.l.b16 %v537
        %v676 = vunpack.c.l.b16 %v538
        %v677 = vunpack.c.l.b16 %v539
        %v678 = vpack.c.b16 %v647, %v646
        %v679 = vpack.c.b16 %v649, %v648
        %v680 = vpack.c.b16 %v651, %v650
        %v681 = vpack.c.b16 %v653, %v652
        %v682 = vpack.c.b16 %v655, %v654
        %v683 = vpack.c.b16 %v657, %v656
        %v684 = vpack.c.b16 %v659, %v658
        %v685 = vpack.c.b16 %v661, %v660
        %v686 = vpack.c.b16 %v663, %v662
        %v687 = vpack.c.b16 %v665, %v664
        %v688 = vpack.c.b16 %v667, %v666
        %v689 = vpack.c.b16 %v669, %v668
        %v690 = vpack.c.b16 %v671, %v670
        %v691 = vpack.c.b16 %v673, %v672
        %v692 = vpack.c.b16 %v675, %v674
        %v693 = vpack.c.b16 %v677, %v676
        %710 = vmatprep.subr.bf16.mxu0 0
        %711 = vmatpush1.bf16.msra.mxu0 %v685
        %712 = vmatprep.subr.bf16.mxu0 0
        %713 = vmatpush1.bf16.msra.mxu0 %v684
        %714 = vmatprep.subr.bf16.mxu0 0
        %715 = vmatpush1.bf16.msra.mxu0 %v683
        %716 = vmatprep.subr.bf16.mxu0 0
        %717 = vmatpush1.bf16.msra.mxu0 %v682
        %718 = vmatprep.subr.bf16.mxu0 0
        %719 = vmatpush1.bf16.msra.mxu0 %v681
        %720 = vmatprep.subr.bf16.mxu0 0
        %721 = vmatpush1.bf16.msra.mxu0 %v680
        %722 = vmatprep.subr.bf16.mxu0 0
        %723 = vmatpush1.bf16.msra.mxu0 %v679
        %724 = vmatprep.subr.bf16.mxu0 0
        %725 = vmatpush1.bf16.msra.mxu0 %v678
        %726 = vmatprep.subr.bf16.mxu0 0
        %727 = vmatpush2.bf16.msra.mxu0 %v693
        %728 = vmatprep.subr.bf16.mxu0 0
        %729 = vmatpush2.bf16.msra.mxu0 %v692
        %730 = vmatprep.subr.bf16.mxu0 0
        %731 = vmatpush2.bf16.msra.mxu0 %v691
        %732 = vmatprep.subr.bf16.mxu0 0
        %733 = vmatpush2.bf16.msra.mxu0 %v690
        %734 = vmatprep.subr.bf16.mxu0 0
        %735 = vmatpush2.bf16.msra.mxu0 %v689
        %736 = vmatprep.subr.bf16.mxu0 0
        %737 = vmatpush2.bf16.msra.mxu0 %v688
        %738 = vmatprep.subr.bf16.mxu0 0
        %739 = vmatpush2.bf16.msra.mxu0 %v687
        %740 = vmatprep.subr.bf16.mxu0 0
        %741 = vmatpush2.bf16.msra.mxu0 %v686
        %742 = vmatprep.mubr.bf16.mxu0 %v587
        %743 = vmatmul.mubr.bf16.gmra.mxu0 %v586
        %v744 = vpop.f32.mrf.mxu0
        %v745 = vadd.f32 %v545, %v744
        %v746 = vpop.f32.mrf.mxu0
        %v747 = vpop.f32.mrf.mxu0
        %v748 = vadd.f32 %v545, %v747
        %v749 = vpop.f32.mrf.mxu0
        %750 = vmatprep.mubr.bf16.mxu0 %v589
        %751 = vmatmul.mubr.bf16.gmra.mxu0 %v588
        %v752 = vpop.f32.mrf.mxu0
        %v753 = vadd.f32 %v545, %v752
        %v754 = vpop.f32.mrf.mxu0
        %v755 = vpop.f32.mrf.mxu0
        %v756 = vadd.f32 %v545, %v755
        %v757 = vpop.f32.mrf.mxu0
        %758 = vmatprep.mubr.bf16.mxu0 %v591
        %759 = vmatmul.mubr.bf16.gmra.mxu0 %v590
        %v760 = vpop.f32.mrf.mxu0
        %v761 = vadd.f32 %v545, %v760
        %v762 = vpop.f32.mrf.mxu0
        %v763 = vpop.f32.mrf.mxu0
        %v764 = vadd.f32 %v545, %v763
        %v765 = vpop.f32.mrf.mxu0
        %766 = vmatprep.mubr.bf16.mxu0 %v593
        %767 = vmatmul.mubr.bf16.gmra.mxu0 %v592
        %v768 = vpop.f32.mrf.mxu0
        %v769 = vadd.f32 %v545, %v768
        %v770 = vpop.f32.mrf.mxu0
        %v771 = vpop.f32.mrf.mxu0
        %v772 = vadd.f32 %v545, %v771
        %v773 = vpop.f32.mrf.mxu0
        %774 = vmatprep.mubr.bf16.mxu0 %v595
        %775 = vmatmul.mubr.bf16.gmra.mxu0 %v594
        %v776 = vpop.f32.mrf.mxu0
        %v777 = vadd.f32 %v545, %v776
        %v778 = vpop.f32.mrf.mxu0
        %v779 = vpop.f32.mrf.mxu0
        %v780 = vadd.f32 %v545, %v779
        %v781 = vpop.f32.mrf.mxu0
        %782 = vmatprep.mubr.bf16.mxu0 %v597
        %783 = vmatmul.mubr.bf16.gmra.mxu0 %v596
        %v784 = vpop.f32.mrf.mxu0
        %v785 = vadd.f32 %v545, %v784
        %v786 = vpop.f32.mrf.mxu0
        %v787 = vpop.f32.mrf.mxu0
        %v788 = vadd.f32 %v545, %v787
        %v789 = vpop.f32.mrf.mxu0
        %790 = vmatprep.mubr.bf16.mxu0 %v599
        %791 = vmatmul.mubr.bf16.gmra.mxu0 %v598
        %v792 = vpop.f32.mrf.mxu0
        %v793 = vadd.f32 %v545, %v792
        %v794 = vpop.f32.mrf.mxu0
        %v795 = vpop.f32.mrf.mxu0
        %v796 = vpop.f32.mrf.mxu0
        %797 = vdwg.mxu0
        %v798 = vmax.f32 %v745, 0.0
        %v799 = vmax.f32 %v748, 0.0
        %v800 = vmax.f32 %v753, 0.0
        %v801 = vmax.f32 %v756, 0.0
        %v802 = vmax.f32 %v761, 0.0
        %v803 = vmax.f32 %v764, 0.0
        %v804 = vmax.f32 %v769, 0.0
        %v805 = vmax.f32 %v772, 0.0
        %v806 = vmax.f32 %v777, 0.0
        %v807 = vmax.f32 %v780, 0.0
        %v808 = vmax.f32 %v785, 0.0
        %v809 = vmax.f32 %v788, 0.0
        %v810 = vmax.f32 %v793, 0.0
        %v811 = vld [vmem:[%s3] sm:$0xf]
        %v812 = vld [vmem:[%s3 + $0x4] sm:$0xf]
        %v813 = vld [vmem:[%s3 + $0x8] sm:$0xf]
        %v814 = vld [vmem:[%s3 + $0xc] sm:$0xf]
        %v815 = vld [vmem:[%s3 + $0x10] sm:$0xf]
        %v816 = vld [vmem:[%s3 + $0x14] sm:$0xf]
        %v817 = vld [vmem:[%s3 + $0x18] sm:$0xf]
        %v818 = vld [vmem:[%s3 + $0x1c] sm:$0xf]
        %v819 = vld [vmem:[%s3 + $0x20] sm:$0xf]
        %v820 = vld [vmem:[%s3 + $0x24] sm:$0xf]
        %v821 = vld [vmem:[%s3 + $0x28] sm:$0xf]
        %v822 = vld [vmem:[%s3 + $0x2c] sm:$0xf]
        %v823 = vld [vmem:[%s3 + $0x30] sm:$0xf]
        %v824 = vld [vmem:[%s3 + $0x34] sm:$0xf]
        %v825 = vld [vmem:[%s3 + $0x38] sm:$0xf]
        %v826 = vld [vmem:[%s3 + $0x3c] sm:$0xf]
        %v827 = vld [vmem:[%s3 + $0x40] sm:$0xf]
        %v828 = vld [vmem:[%s3 + $0x44] sm:$0xf]
        %v829 = vld [vmem:[%s3 + $0x48] sm:$0xf]
        %v830 = vld [vmem:[%s3 + $0x4c] sm:$0xf]
        %v831 = vld [vmem:[%s3 + $0x50] sm:$0xf]
        %v832 = vld [vmem:[%s3 + $0x54] sm:$0xf]
        %v833 = vld [vmem:[%s3 + $0x58] sm:$0xf]
        %v834 = vld [vmem:[%s3 + $0x5c] sm:$0xf]
        %v835 = vld [vmem:[%s3 + $0x60] sm:$0xf]
        %v836 = vld [vmem:[%s3 + $0x64] sm:$0xf]
        %v837 = vld [vmem:[%s3 + $0x68] sm:$0xf]
        %v838 = vld [vmem:[%s3 + $0x6c] sm:$0xf]
        %v839 = vld [vmem:[%s3 + $0x70] sm:$0xf]
        %v840 = vld [vmem:[%s3 + $0x74] sm:$0xf]
        %v841 = vld [vmem:[%s3 + $0x78] sm:$0xf]
        %v842 = vld [vmem:[%s3 + $0x7c] sm:$0xf]
        %v843 = vpack.c.bf16 %v799, %v798
        %v844 = vpack.c.bf16 %v801, %v800
        %v845 = vpack.c.bf16 %v803, %v802
        %v846 = vpack.c.bf16 %v805, %v804
        %v847 = vpack.c.bf16 %v807, %v806
        %v848 = vpack.c.bf16 %v809, %v808
        %v849 = vpack.c.bf16 %v810, %v810
        %v882 = vunpack.c.l.b16 %v811
        %v883 = vunpack.c.l.b16 %v812
        %v884 = vunpack.c.l.b16 %v813
        %v885 = vunpack.c.l.b16 %v814
        %v886 = vunpack.c.l.b16 %v815
        %v887 = vunpack.c.l.b16 %v816
        %v888 = vunpack.c.l.b16 %v817
        %v889 = vunpack.c.l.b16 %v818
        %v890 = vunpack.c.l.b16 %v819
        %v891 = vunpack.c.l.b16 %v820
        %v892 = vunpack.c.l.b16 %v821
        %v893 = vunpack.c.l.b16 %v822
        %v894 = vunpack.c.l.b16 %v823
        %v895 = vunpack.c.l.b16 %v824
        %v896 = vunpack.c.l.b16 %v825
        %v897 = vunpack.c.l.b16 %v826
        %v898 = vunpack.c.l.b16 %v827
        %v899 = vunpack.c.l.b16 %v828
        %v900 = vunpack.c.l.b16 %v829
        %v901 = vunpack.c.l.b16 %v830
        %v902 = vunpack.c.l.b16 %v831
        %v903 = vunpack.c.l.b16 %v832
        %v904 = vunpack.c.l.b16 %v833
        %v905 = vunpack.c.l.b16 %v834
        %v906 = vunpack.c.l.b16 %v835
        %v907 = vunpack.c.l.b16 %v836
        %v908 = vunpack.c.l.b16 %v837
        %v909 = vunpack.c.l.b16 %v838
        %v910 = vunpack.c.l.b16 %v839
        %v911 = vunpack.c.l.b16 %v840
        %v912 = vunpack.c.l.b16 %v841
        %v913 = vunpack.c.l.b16 %v842
        %v914 = vpack.c.b16 %v883, %v882
        %v915 = vpack.c.b16 %v885, %v884
        %v916 = vpack.c.b16 %v887, %v886
        %v917 = vpack.c.b16 %v889, %v888
        %v918 = vpack.c.b16 %v891, %v890
        %v919 = vpack.c.b16 %v893, %v892
        %v920 = vpack.c.b16 %v895, %v894
        %v921 = vpack.c.b16 %v897, %v896
        %v922 = vpack.c.b16 %v899, %v898
        %v923 = vpack.c.b16 %v901, %v900
        %v924 = vpack.c.b16 %v903, %v902
        %v925 = vpack.c.b16 %v905, %v904
        %v926 = vpack.c.b16 %v907, %v906
        %v927 = vpack.c.b16 %v909, %v908
        %v928 = vpack.c.b16 %v911, %v910
        %v929 = vpack.c.b16 %v913, %v912
        %vm930 = vcmask 818176
        %v932 = vsel %vm930, %v914, 0
        %v935 = vsel %vm930, %v915, 0
        %v938 = vsel %vm930, %v916, 0
        %v941 = vsel %vm930, %v917, 0
        %v944 = vsel %vm930, %v918, 0
        %v947 = vsel %vm930, %v919, 0
        %v950 = vsel %vm930, %v920, 0
        %v953 = vsel %vm930, %v921, 0
        %v956 = vsel %vm930, %v922, 0
        %v959 = vsel %vm930, %v923, 0
        %v962 = vsel %vm930, %v924, 0
        %v965 = vsel %vm930, %v925, 0
        %v968 = vsel %vm930, %v926, 0
        %v971 = vsel %vm930, %v927, 0
        %v974 = vsel %vm930, %v928, 0
        %v977 = vsel %vm930, %v929, 0
        %vm979 = vcmask 1041408
        %v981 = vsel %vm979, %v849, 0
        %983 = vmatprep.subr.bf16.mxu0 0
        %984 = vmatpush1.bf16.msra.mxu0 0
        %985 = vmatprep.subr.bf16.mxu0 0
        %986 = vmatpush1.bf16.msra.mxu0 %v981
        %987 = vmatprep.subr.bf16.mxu0 0
        %988 = vmatpush1.bf16.msra.mxu0 %v848
        %989 = vmatprep.subr.bf16.mxu0 0
        %990 = vmatpush1.bf16.msra.mxu0 %v847
        %991 = vmatprep.subr.bf16.mxu0 0
        %992 = vmatpush1.bf16.msra.mxu0 %v846
        %993 = vmatprep.subr.bf16.mxu0 0
        %994 = vmatpush1.bf16.msra.mxu0 %v845
        %995 = vmatprep.subr.bf16.mxu0 0
        %996 = vmatpush1.bf16.msra.mxu0 %v844
        %997 = vmatprep.subr.bf16.mxu0 0
        %998 = vmatpush1.bf16.msra.mxu0 %v843
        %999 = vmatprep.subr.bf16.mxu0 0
        %1000 = vmatpush2.bf16.msra.mxu0 0
        %1001 = vmatprep.subr.bf16.mxu0 0
        %1002 = vmatpush2.bf16.msra.mxu0 0
        %1003 = vmatprep.subr.bf16.mxu0 0
        %1004 = vmatpush2.bf16.msra.mxu0 0
        %1005 = vmatprep.subr.bf16.mxu0 0
        %1006 = vmatpush2.bf16.msra.mxu0 0
        %1007 = vmatprep.subr.bf16.mxu0 0
        %1008 = vmatpush2.bf16.msra.mxu0 0
        %1009 = vmatprep.subr.bf16.mxu0 0
        %1010 = vmatpush2.bf16.msra.mxu0 0
        %1011 = vmatprep.subr.bf16.mxu0 0
        %1012 = vmatpush2.bf16.msra.mxu0 0
        %1013 = vmatprep.subr.bf16.mxu0 0
        %1014 = vmatpush2.bf16.msra.mxu0 0
        %1015 = vmatprep.mubr.bf16.mxu0 0
        %1016 = vmatmul.mubr.bf16.gmra.mxu0 %v932
        %v1017 = vpop.f32.mrf.mxu0
        %v1018 = vadd.f32 0.0, %v1017
        %v1019 = vpop.f32.mrf.mxu0
        %v1020 = vpop.f32.mrf.mxu0
        %v1021 = vadd.f32 0.0, %v1020
        %v1022 = vpop.f32.mrf.mxu0
        %1023 = vmatprep.mubr.bf16.mxu0 0
        %1024 = vmatmul.mubr.bf16.gmra.mxu0 %v935
        %v1025 = vpop.f32.mrf.mxu0
        %v1026 = vadd.f32 0.0, %v1025
        %v1027 = vpop.f32.mrf.mxu0
        %v1028 = vpop.f32.mrf.mxu0
        %v1029 = vadd.f32 0.0, %v1028
        %v1030 = vpop.f32.mrf.mxu0
        %1031 = vmatprep.mubr.bf16.mxu0 0
        %1032 = vmatmul.mubr.bf16.gmra.mxu0 %v938
        %v1033 = vpop.f32.mrf.mxu0
        %v1034 = vadd.f32 0.0, %v1033
        %v1035 = vpop.f32.mrf.mxu0
        %v1036 = vpop.f32.mrf.mxu0
        %v1037 = vadd.f32 0.0, %v1036
        %v1038 = vpop.f32.mrf.mxu0
        %1039 = vmatprep.mubr.bf16.mxu0 0
        %1040 = vmatmul.mubr.bf16.gmra.mxu0 %v941
        %v1041 = vpop.f32.mrf.mxu0
        %v1042 = vadd.f32 0.0, %v1041
        %v1043 = vpop.f32.mrf.mxu0
        %v1044 = vpop.f32.mrf.mxu0
        %v1045 = vadd.f32 0.0, %v1044
        %v1046 = vpop.f32.mrf.mxu0
        %1047 = vmatprep.mubr.bf16.mxu0 0
        %1048 = vmatmul.mubr.bf16.gmra.mxu0 %v944
        %v1049 = vpop.f32.mrf.mxu0
        %v1050 = vadd.f32 0.0, %v1049
        %v1051 = vpop.f32.mrf.mxu0
        %v1052 = vpop.f32.mrf.mxu0
        %v1053 = vadd.f32 0.0, %v1052
        %v1054 = vpop.f32.mrf.mxu0
        %1055 = vmatprep.mubr.bf16.mxu0 0
        %1056 = vmatmul.mubr.bf16.gmra.mxu0 %v947
        %v1057 = vpop.f32.mrf.mxu0
        %v1058 = vadd.f32 0.0, %v1057
        %v1059 = vpop.f32.mrf.mxu0
        %v1060 = vpop.f32.mrf.mxu0
        %v1061 = vadd.f32 0.0, %v1060
        %v1062 = vpop.f32.mrf.mxu0
        %1063 = vmatprep.mubr.bf16.mxu0 0
        %1064 = vmatmul.mubr.bf16.gmra.mxu0 %v950
        %v1065 = vpop.f32.mrf.mxu0
        %v1066 = vadd.f32 0.0, %v1065
        %v1067 = vpop.f32.mrf.mxu0
        %v1068 = vpop.f32.mrf.mxu0
        %v1069 = vadd.f32 0.0, %v1068
        %v1070 = vpop.f32.mrf.mxu0
        %1071 = vmatprep.mubr.bf16.mxu0 0
        %1072 = vmatmul.mubr.bf16.gmra.mxu0 %v953
        %v1073 = vpop.f32.mrf.mxu0
        %v1074 = vadd.f32 0.0, %v1073
        %v1075 = vpop.f32.mrf.mxu0
        %v1076 = vpop.f32.mrf.mxu0
        %v1077 = vadd.f32 0.0, %v1076
        %v1078 = vpop.f32.mrf.mxu0
        %1079 = vmatprep.mubr.bf16.mxu0 0
        %1080 = vmatmul.mubr.bf16.gmra.mxu0 %v956
        %v1081 = vpop.f32.mrf.mxu0
        %v1082 = vadd.f32 0.0, %v1081
        %v1083 = vpop.f32.mrf.mxu0
        %v1084 = vpop.f32.mrf.mxu0
        %v1085 = vadd.f32 0.0, %v1084
        %v1086 = vpop.f32.mrf.mxu0
        %1087 = vmatprep.mubr.bf16.mxu0 0
        %1088 = vmatmul.mubr.bf16.gmra.mxu0 %v959
        %v1089 = vpop.f32.mrf.mxu0
        %v1090 = vadd.f32 0.0, %v1089
        %v1091 = vpop.f32.mrf.mxu0
        %v1092 = vpop.f32.mrf.mxu0
        %v1093 = vadd.f32 0.0, %v1092
        %v1094 = vpop.f32.mrf.mxu0
        %1095 = vmatprep.mubr.bf16.mxu0 0
        %1096 = vmatmul.mubr.bf16.gmra.mxu0 %v962
        %v1097 = vpop.f32.mrf.mxu0
        %v1098 = vadd.f32 0.0, %v1097
        %v1099 = vpop.f32.mrf.mxu0
        %v1100 = vpop.f32.mrf.mxu0
        %v1101 = vadd.f32 0.0, %v1100
        %v1102 = vpop.f32.mrf.mxu0
        %1103 = vmatprep.mubr.bf16.mxu0 0
        %1104 = vmatmul.mubr.bf16.gmra.mxu0 %v965
        %v1105 = vpop.f32.mrf.mxu0
        %v1106 = vadd.f32 0.0, %v1105
        %v1107 = vpop.f32.mrf.mxu0
        %v1108 = vpop.f32.mrf.mxu0
        %v1109 = vadd.f32 0.0, %v1108
        %v1110 = vpop.f32.mrf.mxu0
        %1111 = vmatprep.mubr.bf16.mxu0 0
        %1112 = vmatmul.mubr.bf16.gmra.mxu0 %v968
        %v1113 = vpop.f32.mrf.mxu0
        %v1114 = vadd.f32 0.0, %v1113
        %v1115 = vpop.f32.mrf.mxu0
        %v1116 = vpop.f32.mrf.mxu0
        %v1117 = vadd.f32 0.0, %v1116
        %v1118 = vpop.f32.mrf.mxu0
        %1119 = vmatprep.mubr.bf16.mxu0 0
        %1120 = vmatmul.mubr.bf16.gmra.mxu0 %v971
        %v1121 = vpop.f32.mrf.mxu0
        %v1122 = vadd.f32 0.0, %v1121
        %v1123 = vpop.f32.mrf.mxu0
        %v1124 = vpop.f32.mrf.mxu0
        %v1125 = vadd.f32 0.0, %v1124
        %v1126 = vpop.f32.mrf.mxu0
        %1127 = vmatprep.mubr.bf16.mxu0 0
        %1128 = vmatmul.mubr.bf16.gmra.mxu0 %v974
        %v1129 = vpop.f32.mrf.mxu0
        %v1130 = vadd.f32 0.0, %v1129
        %v1131 = vpop.f32.mrf.mxu0
        %v1132 = vpop.f32.mrf.mxu0
        %v1133 = vadd.f32 0.0, %v1132
        %v1134 = vpop.f32.mrf.mxu0
        %1135 = vmatprep.mubr.bf16.mxu0 0
        %1136 = vmatmul.mubr.bf16.gmra.mxu0 %v977
        %v1137 = vpop.f32.mrf.mxu0
        %v1138 = vadd.f32 0.0, %v1137
        %v1139 = vpop.f32.mrf.mxu0
        %v1140 = vpop.f32.mrf.mxu0
        %v1141 = vadd.f32 0.0, %v1140
        %v1142 = vpop.f32.mrf.mxu0
        %1143 = vdwg.mxu0
        %1146 = vrot.lane.b32.xlu0 %v1026, 32
        %v1147 = vpop.permute.xlu0 %1146
        %1148 = vrot.lane.b32.xlu0 %v1029, 32
        %v1149 = vpop.permute.xlu0 %1148
        %1154 = vrot.lane.b32.xlu0 %v1034, 64
        %v1155 = vpop.permute.xlu0 %1154
        %1156 = vrot.lane.b32.xlu0 %v1037, 64
        %v1157 = vpop.permute.xlu0 %1156
        %1162 = vrot.lane.b32.xlu0 %v1042, 96
        %v1163 = vpop.permute.xlu0 %1162
        %1164 = vrot.lane.b32.xlu0 %v1045, 96
        %v1165 = vpop.permute.xlu0 %1164
        %1170 = vrot.lane.b32.xlu0 %v1058, 32
        %v1171 = vpop.permute.xlu0 %1170
        %1172 = vrot.lane.b32.xlu0 %v1061, 32
        %v1173 = vpop.permute.xlu0 %1172
        %1178 = vrot.lane.b32.xlu0 %v1066, 64
        %v1179 = vpop.permute.xlu0 %1178
        %1180 = vrot.lane.b32.xlu0 %v1069, 64
        %v1181 = vpop.permute.xlu0 %1180
        %1186 = vrot.lane.b32.xlu0 %v1074, 96
        %v1187 = vpop.permute.xlu0 %1186
        %1188 = vrot.lane.b32.xlu0 %v1077, 96
        %v1189 = vpop.permute.xlu0 %1188
        %1194 = vrot.lane.b32.xlu0 %v1090, 32
        %v1195 = vpop.permute.xlu0 %1194
        %1196 = vrot.lane.b32.xlu0 %v1093, 32
        %v1197 = vpop.permute.xlu0 %1196
        %1202 = vrot.lane.b32.xlu0 %v1098, 64
        %v1203 = vpop.permute.xlu0 %1202
        %1204 = vrot.lane.b32.xlu0 %v1101, 64
        %v1205 = vpop.permute.xlu0 %1204
        %1210 = vrot.lane.b32.xlu0 %v1106, 96
        %v1211 = vpop.permute.xlu0 %1210
        %1212 = vrot.lane.b32.xlu0 %v1109, 96
        %v1213 = vpop.permute.xlu0 %1212
        %1218 = vrot.lane.b32.xlu0 %v1122, 32
        %v1219 = vpop.permute.xlu0 %1218
        %1220 = vrot.lane.b32.xlu0 %v1125, 32
        %v1221 = vpop.permute.xlu0 %1220
        %1226 = vrot.lane.b32.xlu0 %v1130, 64
        %v1227 = vpop.permute.xlu0 %1226
        %1228 = vrot.lane.b32.xlu0 %v1133, 64
        %v1229 = vpop.permute.xlu0 %1228
        %1234 = vrot.lane.b32.xlu0 %v1138, 96
        %v1235 = vpop.permute.xlu0 %1234
        %1236 = vrot.lane.b32.xlu0 %v1141, 96
        %v1237 = vpop.permute.xlu0 %1236
        %vm1240 = vcmask 261120
        %v1241 = vsel %vm1240, %v1018, %v1147
        %v1242 = vsel %vm1240, %v1021, %v1149
        %vm1243 = vcmask 523264
        %v1244 = vsel %vm1243, %v1241, %v1155
        %v1245 = vsel %vm1243, %v1242, %v1157
        %vm1246 = vcmask 785408
        %v1247 = vsel %vm1246, %v1244, %v1163
        %v1248 = vsel %vm1246, %v1245, %v1165
        %v1249 = vsel %vm1240, %v1050, %v1171
        %v1250 = vsel %vm1240, %v1053, %v1173
        %v1251 = vsel %vm1243, %v1249, %v1179
        %v1252 = vsel %vm1243, %v1250, %v1181
        %v1253 = vsel %vm1246, %v1251, %v1187
        %v1254 = vsel %vm1246, %v1252, %v1189
        %v1255 = vsel %vm1240, %v1082, %v1195
        %v1256 = vsel %vm1240, %v1085, %v1197
        %v1257 = vsel %vm1243, %v1255, %v1203
        %v1258 = vsel %vm1243, %v1256, %v1205
        %v1259 = vsel %vm1246, %v1257, %v1211
        %v1260 = vsel %vm1246, %v1258, %v1213
        %v1261 = vsel %vm1240, %v1114, %v1219
        %v1262 = vsel %vm1240, %v1117, %v1221
        %v1263 = vsel %vm1243, %v1261, %v1227
        %v1264 = vsel %vm1243, %v1262, %v1229
        %v1265 = vsel %vm1246, %v1263, %v1235
        %v1266 = vsel %vm1246, %v1264, %v1237
        %v1267 = vpack.c.bf16 %v1248, %v1247
        %v1268 = vpack.c.bf16 %v1254, %v1253
        %v1269 = vpack.c.bf16 %v1260, %v1259
        %v1270 = vpack.c.bf16 %v1266, %v1265
        %v1271 = vld [vmem:[%s4] sm:$0xf]
        %v1272 = vld [vmem:[%s4 + $0x4] sm:$0xf]
        %v1273 = vld [vmem:[%s4 + $0x8] sm:$0xf]
        %v1274 = vld [vmem:[%s4 + $0xc] sm:$0xf]
        %v1275 = vld [vmem:[%s4 + $0x10] sm:$0xf]
        %v1276 = vld [vmem:[%s4 + $0x14] sm:$0xf]
        %v1277 = vld [vmem:[%s4 + $0x18] sm:$0xf]
        %v1278 = vld [vmem:[%s4 + $0x1c] sm:$0xf]
        %v1279 = vld [vmem:[%s4 + $0x20] sm:$0xf]
        %v1280 = vld [vmem:[%s4 + $0x24] sm:$0xf]
        %v1281 = vld [vmem:[%s4 + $0x28] sm:$0xf]
        %v1282 = vld [vmem:[%s4 + $0x2c] sm:$0xf]
        %v1283 = vld [vmem:[%s4 + $0x30] sm:$0xf]
        %v1284 = vld [vmem:[%s4 + $0x34] sm:$0xf]
        %v1285 = vld [vmem:[%s4 + $0x38] sm:$0xf]
        %v1286 = vld [vmem:[%s4 + $0x3c] sm:$0xf]
        %v1287 = vld [vmem:[%s4 + $0x40] sm:$0xf]
        %v1288 = vld [vmem:[%s4 + $0x44] sm:$0xf]
        %v1289 = vld [vmem:[%s4 + $0x48] sm:$0xf]
        %v1290 = vld [vmem:[%s4 + $0x4c] sm:$0xf]
        %v1291 = vld [vmem:[%s4 + $0x50] sm:$0xf]
        %v1292 = vld [vmem:[%s4 + $0x54] sm:$0xf]
        %v1293 = vld [vmem:[%s4 + $0x58] sm:$0xf]
        %v1294 = vld [vmem:[%s4 + $0x5c] sm:$0xf]
        %v1295 = vld [vmem:[%s4 + $0x60] sm:$0xf]
        %v1296 = vld [vmem:[%s4 + $0x64] sm:$0xf]
        %v1297 = vld [vmem:[%s4 + $0x68] sm:$0xf]
        %v1298 = vld [vmem:[%s4 + $0x6c] sm:$0xf]
        %v1299 = vld [vmem:[%s4 + $0x70] sm:$0xf]
        %v1300 = vld [vmem:[%s4 + $0x74] sm:$0xf]
        %v1301 = vld [vmem:[%s4 + $0x78] sm:$0xf]
        %v1302 = vld [vmem:[%s4 + $0x7c] sm:$0xf]
        %v1303 = vld [vmem:[%s4 + $0x80] sm:$0xf]
        %v1304 = vld [vmem:[%s4 + $0x84] sm:$0xf]
        %v1305 = vld [vmem:[%s4 + $0x88] sm:$0xf]
        %v1306 = vld [vmem:[%s4 + $0x8c] sm:$0xf]
        %v1307 = vld [vmem:[%s4 + $0x90] sm:$0xf]
        %v1308 = vld [vmem:[%s4 + $0x94] sm:$0xf]
        %v1309 = vld [vmem:[%s4 + $0x98] sm:$0xf]
        %v1310 = vld [vmem:[%s4 + $0x9c] sm:$0xf]
        %v1311 = vld [vmem:[%s4 + $0xa0] sm:$0xf]
        %v1312 = vld [vmem:[%s4 + $0xa4] sm:$0xf]
        %v1313 = vld [vmem:[%s4 + $0xa8] sm:$0xf]
        %v1314 = vld [vmem:[%s4 + $0xac] sm:$0xf]
        %v1315 = vld [vmem:[%s4 + $0xb0] sm:$0xf]
        %v1316 = vld [vmem:[%s4 + $0xb4] sm:$0xf]
        %v1317 = vld [vmem:[%s4 + $0xb8] sm:$0xf]
        %v1318 = vld [vmem:[%s4 + $0xbc] sm:$0xf]
        %v1319 = vld [vmem:[%s4 + $0xc0] sm:$0xf]
        %v1320 = vld [vmem:[%s4 + $0xc4] sm:$0xf]
        %v1321 = vld [vmem:[%s4 + $0xc8] sm:$0xf]
        %v1322 = vld [vmem:[%s4 + $0xcc] sm:$0xf]
        %v1323 = vld [vmem:[%s4 + $0xd0] sm:$0xf]
        %v1324 = vld [vmem:[%s4 + $0xd4] sm:$0xf]
        %v1325 = vld [vmem:[%s4 + $0xd8] sm:$0xf]
        %v1326 = vld [vmem:[%s4 + $0xdc] sm:$0xf]
        %v1327 = vld [vmem:[%s4 + $0xe0] sm:$0xf]
        %v1328 = vld [vmem:[%s4 + $0xe4] sm:$0xf]
        %v1329 = vld [vmem:[%s4 + $0xe8] sm:$0xf]
        %v1330 = vld [vmem:[%s4 + $0xec] sm:$0xf]
        %v1331 = vld [vmem:[%s4 + $0xf0] sm:$0xf]
        %v1332 = vld [vmem:[%s4 + $0xf4] sm:$0xf]
        %v1333 = vld [vmem:[%s4 + $0xf8] sm:$0xf]
        %v1334 = vld [vmem:[%s4 + $0xfc] sm:$0xf]
        %v1335 = vld [vmem:[%s5] sm:$0x1]
        %v1337 = vlaneseq
        %v1338 = vshrl.u32 %v1337, 7
        %v1339 = vsub.s32 0, %v1338
        %v1340 = vrot.slane %v1335, %v1339
        %v1406 = vunpack.c.l.b16 %v1271
        %v1407 = vunpack.c.l.b16 %v1272
        %v1408 = vunpack.c.l.b16 %v1273
        %v1409 = vunpack.c.l.b16 %v1274
        %v1410 = vunpack.c.l.b16 %v1275
        %v1411 = vunpack.c.l.b16 %v1276
        %v1412 = vunpack.c.l.b16 %v1277
        %v1413 = vunpack.c.l.b16 %v1278
        %v1414 = vunpack.c.l.b16 %v1279
        %v1415 = vunpack.c.l.b16 %v1280
        %v1416 = vunpack.c.l.b16 %v1281
        %v1417 = vunpack.c.l.b16 %v1282
        %v1418 = vunpack.c.l.b16 %v1283
        %v1419 = vunpack.c.l.b16 %v1284
        %v1420 = vunpack.c.l.b16 %v1285
        %v1421 = vunpack.c.l.b16 %v1286
        %v1422 = vunpack.c.l.b16 %v1287
        %v1423 = vunpack.c.l.b16 %v1288
        %v1424 = vunpack.c.l.b16 %v1289
        %v1425 = vunpack.c.l.b16 %v1290
        %v1426 = vunpack.c.l.b16 %v1291
        %v1427 = vunpack.c.l.b16 %v1292
        %v1428 = vunpack.c.l.b16 %v1293
        %v1429 = vunpack.c.l.b16 %v1294
        %v1430 = vunpack.c.l.b16 %v1295
        %v1431 = vunpack.c.l.b16 %v1296
        %v1432 = vunpack.c.l.b16 %v1297
        %v1433 = vunpack.c.l.b16 %v1298
        %v1434 = vunpack.c.l.b16 %v1299
        %v1435 = vunpack.c.l.b16 %v1300
        %v1436 = vunpack.c.l.b16 %v1301
        %v1437 = vunpack.c.l.b16 %v1302
        %v1438 = vunpack.c.l.b16 %v1303
        %v1439 = vunpack.c.l.b16 %v1304
        %v1440 = vunpack.c.l.b16 %v1305
        %v1441 = vunpack.c.l.b16 %v1306
        %v1442 = vunpack.c.l.b16 %v1307
        %v1443 = vunpack.c.l.b16 %v1308
        %v1444 = vunpack.c.l.b16 %v1309
        %v1445 = vunpack.c.l.b16 %v1310
        %v1446 = vunpack.c.l.b16 %v1311
        %v1447 = vunpack.c.l.b16 %v1312
        %v1448 = vunpack.c.l.b16 %v1313
        %v1449 = vunpack.c.l.b16 %v1314
        %v1450 = vunpack.c.l.b16 %v1315
        %v1451 = vunpack.c.l.b16 %v1316
        %v1452 = vunpack.c.l.b16 %v1317
        %v1453 = vunpack.c.l.b16 %v1318
        %v1454 = vunpack.c.l.b16 %v1319
        %v1455 = vunpack.c.l.b16 %v1320
        %v1456 = vunpack.c.l.b16 %v1321
        %v1457 = vunpack.c.l.b16 %v1322
        %v1458 = vunpack.c.l.b16 %v1323
        %v1459 = vunpack.c.l.b16 %v1324
        %v1460 = vunpack.c.l.b16 %v1325
        %v1461 = vunpack.c.l.b16 %v1326
        %v1462 = vunpack.c.l.b16 %v1327
        %v1463 = vunpack.c.l.b16 %v1328
        %v1464 = vunpack.c.l.b16 %v1329
        %v1465 = vunpack.c.l.b16 %v1330
        %v1466 = vunpack.c.l.b16 %v1331
        %v1467 = vunpack.c.l.b16 %v1332
        %v1468 = vunpack.c.l.b16 %v1333
        %v1469 = vunpack.c.l.b16 %v1334
        %v1470 = vpack.c.b16 %v1407, %v1406
        %v1471 = vpack.c.b16 %v1409, %v1408
        %v1472 = vpack.c.b16 %v1411, %v1410
        %v1473 = vpack.c.b16 %v1413, %v1412
        %v1474 = vpack.c.b16 %v1415, %v1414
        %v1475 = vpack.c.b16 %v1417, %v1416
        %v1476 = vpack.c.b16 %v1419, %v1418
        %v1477 = vpack.c.b16 %v1421, %v1420
        %v1478 = vpack.c.b16 %v1423, %v1422
        %v1479 = vpack.c.b16 %v1425, %v1424
        %v1480 = vpack.c.b16 %v1427, %v1426
        %v1481 = vpack.c.b16 %v1429, %v1428
        %v1482 = vpack.c.b16 %v1431, %v1430
        %v1483 = vpack.c.b16 %v1433, %v1432
        %v1484 = vpack.c.b16 %v1435, %v1434
        %v1485 = vpack.c.b16 %v1437, %v1436
        %v1486 = vpack.c.b16 %v1439, %v1438
        %v1487 = vpack.c.b16 %v1441, %v1440
        %v1488 = vpack.c.b16 %v1443, %v1442
        %v1489 = vpack.c.b16 %v1445, %v1444
        %v1490 = vpack.c.b16 %v1447, %v1446
        %v1491 = vpack.c.b16 %v1449, %v1448
        %v1492 = vpack.c.b16 %v1451, %v1450
        %v1493 = vpack.c.b16 %v1453, %v1452
        %v1494 = vpack.c.b16 %v1455, %v1454
        %v1495 = vpack.c.b16 %v1457, %v1456
        %v1496 = vpack.c.b16 %v1459, %v1458
        %v1497 = vpack.c.b16 %v1461, %v1460
        %v1498 = vpack.c.b16 %v1463, %v1462
        %v1499 = vpack.c.b16 %v1465, %v1464
        %v1500 = vpack.c.b16 %v1467, %v1466
        %v1501 = vpack.c.b16 %v1469, %v1468
        %1534 = vmatprep.subr.bf16.mxu0 0
        %1535 = vmatpush1.bf16.msra.mxu0 %v1477
        %1536 = vmatprep.subr.bf16.mxu0 0
        %1537 = vmatpush1.bf16.msra.mxu0 %v1476
        %1538 = vmatprep.subr.bf16.mxu0 0
        %1539 = vmatpush1.bf16.msra.mxu0 %v1475
        %1540 = vmatprep.subr.bf16.mxu0 0
        %1541 = vmatpush1.bf16.msra.mxu0 %v1474
        %1542 = vmatprep.subr.bf16.mxu0 0
        %1543 = vmatpush1.bf16.msra.mxu0 %v1473
        %1544 = vmatprep.subr.bf16.mxu0 0
        %1545 = vmatpush1.bf16.msra.mxu0 %v1472
        %1546 = vmatprep.subr.bf16.mxu0 0
        %1547 = vmatpush1.bf16.msra.mxu0 %v1471
        %1548 = vmatprep.subr.bf16.mxu0 0
        %1549 = vmatpush1.bf16.msra.mxu0 %v1470
        %1550 = vmatprep.subr.bf16.mxu0 0
        %1551 = vmatpush2.bf16.msra.mxu0 %v1485
        %1552 = vmatprep.subr.bf16.mxu0 0
        %1553 = vmatpush2.bf16.msra.mxu0 %v1484
        %1554 = vmatprep.subr.bf16.mxu0 0
        %1555 = vmatpush2.bf16.msra.mxu0 %v1483
        %1556 = vmatprep.subr.bf16.mxu0 0
        %1557 = vmatpush2.bf16.msra.mxu0 %v1482
        %1558 = vmatprep.subr.bf16.mxu0 0
        %1559 = vmatpush2.bf16.msra.mxu0 %v1481
        %1560 = vmatprep.subr.bf16.mxu0 0
        %1561 = vmatpush2.bf16.msra.mxu0 %v1480
        %1562 = vmatprep.subr.bf16.mxu0 0
        %1563 = vmatpush2.bf16.msra.mxu0 %v1479
        %1564 = vmatprep.subr.bf16.mxu0 0
        %1565 = vmatpush2.bf16.msra.mxu0 %v1478
        %1566 = vmatprep.mubr.bf16.mxu0 %v1268
        %1567 = vmatmul.mubr.bf16.gmra.mxu0 %v1267
        %v1568 = vpop.f32.mrf.mxu0
        %v1569 = vadd.f32 %v1340, %v1568
        %v1570 = vpop.f32.mrf.mxu0
        %v1571 = vpop.f32.mrf.mxu0
        %v1572 = vadd.f32 %v1340, %v1571
        %v1573 = vpop.f32.mrf.mxu0
        %1574 = vdwg.mxu0
        %1575 = vmatprep.subr.bf16.mxu0 0
        %1576 = vmatpush1.bf16.msra.mxu0 %v1493
        %1577 = vmatprep.subr.bf16.mxu0 0
        %1578 = vmatpush1.bf16.msra.mxu0 %v1492
        %1579 = vmatprep.subr.bf16.mxu0 0
        %1580 = vmatpush1.bf16.msra.mxu0 %v1491
        %1581 = vmatprep.subr.bf16.mxu0 0
        %1582 = vmatpush1.bf16.msra.mxu0 %v1490
        %1583 = vmatprep.subr.bf16.mxu0 0
        %1584 = vmatpush1.bf16.msra.mxu0 %v1489
        %1585 = vmatprep.subr.bf16.mxu0 0
        %1586 = vmatpush1.bf16.msra.mxu0 %v1488
        %1587 = vmatprep.subr.bf16.mxu0 0
        %1588 = vmatpush1.bf16.msra.mxu0 %v1487
        %1589 = vmatprep.subr.bf16.mxu0 0
        %1590 = vmatpush1.bf16.msra.mxu0 %v1486
        %1591 = vmatprep.subr.bf16.mxu0 0
        %1592 = vmatpush2.bf16.msra.mxu0 %v1501
        %1593 = vmatprep.subr.bf16.mxu0 0
        %1594 = vmatpush2.bf16.msra.mxu0 %v1500
        %1595 = vmatprep.subr.bf16.mxu0 0
        %1596 = vmatpush2.bf16.msra.mxu0 %v1499
        %1597 = vmatprep.subr.bf16.mxu0 0
        %1598 = vmatpush2.bf16.msra.mxu0 %v1498
        %1599 = vmatprep.subr.bf16.mxu0 0
        %1600 = vmatpush2.bf16.msra.mxu0 %v1497
        %1601 = vmatprep.subr.bf16.mxu0 0
        %1602 = vmatpush2.bf16.msra.mxu0 %v1496
        %1603 = vmatprep.subr.bf16.mxu0 0
        %1604 = vmatpush2.bf16.msra.mxu0 %v1495
        %1605 = vmatprep.subr.bf16.mxu0 0
        %1606 = vmatpush2.bf16.msra.mxu0 %v1494
        %1607 = vmatprep.mubr.bf16.mxu0 %v1270
        %1608 = vmatmul.mubr.bf16.gmra.mxu0 %v1269
        %v1609 = vpop.f32.mrf.mxu0
        %v1610 = vadd.f32 %v1569, %v1609
        %v1611 = vpop.f32.mrf.mxu0
        %v1612 = vpop.f32.mrf.mxu0
        %v1613 = vadd.f32 %v1572, %v1612
        %v1614 = vpop.f32.mrf.mxu0
        %1615 = vdwg.mxu0
        %v1616 = vmax.f32 %v1610, 0.0
        %v1617 = vmax.f32 %v1613, 0.0
        %v1618 = vld [vmem:[%s6] sm:$0xf]
        %v1619 = vld [vmem:[%s6 + $0x4] sm:$0xf]
        %v1620 = vld [vmem:[%s6 + $0x8] sm:$0xf]
        %v1621 = vld [vmem:[%s6 + $0xc] sm:$0xf]
        %v1622 = vld [vmem:[%s6 + $0x10] sm:$0x3]
        %v1623 = vpack.c.bf16 %v1617, %v1616
        %v1629 = vunpack.c.l.b16 %v1618
        %v1630 = vunpack.c.l.b16 %v1619
        %v1631 = vunpack.c.l.b16 %v1620
        %v1632 = vunpack.c.l.b16 %v1621
        %v1633 = vunpack.c.l.b16 %v1622
        %v1634 = vpack.c.b16 %v1630, %v1629
        %v1635 = vpack.c.b16 %v1632, %v1631
        %v1636 = vpack.c.b16 %v1633, %v1633
        %vm1637 = vcmask 130048
        %v1639 = vsel %vm1637, %v1634, 0
        %v1642 = vsel %vm1637, %v1635, 0
        %v1645 = vsel %vm1637, %v1636, 0
        %1647 = vmatprep.subr.bf16.mxu0 0
        %1648 = vmatpush1.bf16.msra.mxu0 0
        %1649 = vmatprep.subr.bf16.mxu0 0
        %1650 = vmatpush1.bf16.msra.mxu0 0
        %1651 = vmatprep.subr.bf16.mxu0 0
        %1652 = vmatpush1.bf16.msra.mxu0 0
        %1653 = vmatprep.subr.bf16.mxu0 0
        %1654 = vmatpush1.bf16.msra.mxu0 0
        %1655 = vmatprep.subr.bf16.mxu0 0
        %1656 = vmatpush1.bf16.msra.mxu0 0
        %1657 = vmatprep.subr.bf16.mxu0 0
        %1658 = vmatpush1.bf16.msra.mxu0 0
        %1659 = vmatprep.subr.bf16.mxu0 0
        %1660 = vmatpush1.bf16.msra.mxu0 0
        %1661 = vmatprep.subr.bf16.mxu0 0
        %1662 = vmatpush1.bf16.msra.mxu0 %v1623
        %1663 = vmatprep.subr.bf16.mxu0 0
        %1664 = vmatpush2.bf16.msra.mxu0 0
        %1665 = vmatprep.subr.bf16.mxu0 0
        %1666 = vmatpush2.bf16.msra.mxu0 0
        %1667 = vmatprep.subr.bf16.mxu0 0
        %1668 = vmatpush2.bf16.msra.mxu0 0
        %1669 = vmatprep.subr.bf16.mxu0 0
        %1670 = vmatpush2.bf16.msra.mxu0 0
        %1671 = vmatprep.subr.bf16.mxu0 0
        %1672 = vmatpush2.bf16.msra.mxu0 0
        %1673 = vmatprep.subr.bf16.mxu0 0
        %1674 = vmatpush2.bf16.msra.mxu0 0
        %1675 = vmatprep.subr.bf16.mxu0 0
        %1676 = vmatpush2.bf16.msra.mxu0 0
        %1677 = vmatprep.subr.bf16.mxu0 0
        %1678 = vmatpush2.bf16.msra.mxu0 0
        %1679 = vmatprep.mubr.bf16.mxu0 0
        %1680 = vmatmul.mubr.bf16.gmra.mxu0 %v1639
        %v1681 = vpop.f32.mrf.mxu0
        %v1682 = vadd.f32 0.0, %v1681
        %v1683 = vpop.f32.mrf.mxu0
        %v1684 = vpop.f32.mrf.mxu0
        %v1685 = vadd.f32 0.0, %v1684
        %v1686 = vpop.f32.mrf.mxu0
        %1687 = vmatprep.mubr.bf16.mxu0 0
        %1688 = vmatmul.mubr.bf16.gmra.mxu0 %v1642
        %v1689 = vpop.f32.mrf.mxu0
        %v1690 = vadd.f32 0.0, %v1689
        %v1691 = vpop.f32.mrf.mxu0
        %v1692 = vpop.f32.mrf.mxu0
        %v1693 = vadd.f32 0.0, %v1692
        %v1694 = vpop.f32.mrf.mxu0
        %1695 = vmatprep.mubr.bf16.mxu0 0
        %1696 = vmatmul.mubr.bf16.gmra.mxu0 %v1645
        %v1697 = vpop.f32.mrf.mxu0
        %v1698 = vadd.f32 0.0, %v1697
        %v1699 = vpop.f32.mrf.mxu0
        %v1700 = vpop.f32.mrf.mxu0
        %v1701 = vpop.f32.mrf.mxu0
        %1702 = vdwg.mxu0
        %v1704 = vrot.slane %v1682, 4
        %1705 = vrot.lane.b32.xlu0 %v1704, 64
        %v1706 = vpop.permute.xlu0 %1705
        %v1709 = vrot.slane %v1685, 4
        %1710 = vrot.lane.b32.xlu0 %v1709, 64
        %v1711 = vpop.permute.xlu0 %1710
        %v1714 = vrot.slane %v1690, 4
        %1715 = vrot.lane.b32.xlu0 %v1714, 64
        %v1716 = vpop.permute.xlu0 %1715
        %v1719 = vrot.slane %v1693, 4
        %1720 = vrot.lane.b32.xlu0 %v1719, 64
        %v1721 = vpop.permute.xlu0 %1720
        %v1723 = vsel %vm1243, %v1682, %v1706
        %v1724 = vsel %vm1243, %v1685, %v1711
        %v1725 = vsel %vm1243, %v1690, %v1716
        %v1726 = vsel %vm1243, %v1693, %v1721
        %v1727 = vpack.c.bf16 %v1723, %v1723
        %v1728 = vpack.c.bf16 %v1724, %v1724
        %v1729 = vpack.c.bf16 %v1725, %v1725
        %v1730 = vpack.c.bf16 %v1726, %v1726
        %v1731 = vpack.c.bf16 %v1698, %v1698
        %v1732 = vld [vmem:[%s7] sm:$0xf]
        %v1733 = vld [vmem:[%s7 + $0x4] sm:$0xf]
        %v1734 = vld [vmem:[%s7 + $0x8] sm:$0xf]
        %v1735 = vld [vmem:[%s7 + $0xc] sm:$0xf]
        %v1736 = vld [vmem:[%s7 + $0x10] sm:$0xf]
        %v1737 = vld [vmem:[%s7 + $0x14] sm:$0xf]
        %v1738 = vld [vmem:[%s7 + $0x18] sm:$0xf]
        %v1739 = vld [vmem:[%s7 + $0x1c] sm:$0xf]
        %v1740 = vld [vmem:[%s7 + $0x20] sm:$0xf]
        %v1741 = vld [vmem:[%s7 + $0x24] sm:$0xf]
        %v1742 = vld [vmem:[%s7 + $0x28] sm:$0xf]
        %v1743 = vld [vmem:[%s7 + $0x2c] sm:$0xf]
        %v1744 = vld [vmem:[%s7 + $0x30] sm:$0xf]
        %v1745 = vld [vmem:[%s7 + $0x34] sm:$0xf]
        %v1746 = vld [vmem:[%s7 + $0x38] sm:$0xf]
        %v1747 = vld [vmem:[%s7 + $0x3c] sm:$0xf]
        %v1748 = vld [vmem:[%s7 + $0x40] sm:$0xf]
        %v1749 = vld [vmem:[%s7 + $0x44] sm:$0xf]
        %v1750 = vld [vmem:[%s7 + $0x48] sm:$0xf]
        %v1751 = vld [vmem:[%s7 + $0x4c] sm:$0xf]
        %v1752 = vld [vmem:[%s7 + $0x50] sm:$0xf]
        %v1753 = vld [vmem:[%s7 + $0x54] sm:$0xf]
        %v1754 = vld [vmem:[%s7 + $0x58] sm:$0xf]
        %v1755 = vld [vmem:[%s7 + $0x5c] sm:$0xf]
        %v1756 = vld [vmem:[%s7 + $0x60] sm:$0xf]
        %v1757 = vld [vmem:[%s7 + $0x64] sm:$0xf]
        %v1758 = vld [vmem:[%s7 + $0x68] sm:$0xf]
        %v1759 = vld [vmem:[%s7 + $0x6c] sm:$0xf]
        %v1760 = vld [vmem:[%s7 + $0x70] sm:$0xf]
        %v1761 = vld [vmem:[%s7 + $0x74] sm:$0xf]
        %v1762 = vld [vmem:[%s7 + $0x78] sm:$0xf]
        %v1763 = vld [vmem:[%s7 + $0x7c] sm:$0xf]
        %v1764 = vld [vmem:[%s7 + $0x80] sm:$0xf]
        %v1765 = vld [vmem:[%s7 + $0x84] sm:$0xf]
        %v1766 = vld [vmem:[%s7 + $0x88] sm:$0xf]
        %v1767 = vld [vmem:[%s7 + $0x8c] sm:$0xf]
        %v1768 = vld [vmem:[%s7 + $0x90] sm:$0xf]
        %v1769 = vld [vmem:[%s7 + $0x94] sm:$0xf]
        %v1770 = vld [vmem:[%s7 + $0x98] sm:$0xf]
        %v1771 = vld [vmem:[%s7 + $0x9c] sm:$0xf]
        %v1772 = vld [vmem:[%s7 + $0xa0] sm:$0xf]
        %v1773 = vld [vmem:[%s7 + $0xa4] sm:$0xf]
        %v1774 = vld [vmem:[%s7 + $0xa8] sm:$0xf]
        %v1775 = vld [vmem:[%s7 + $0xac] sm:$0xf]
        %v1776 = vld [vmem:[%s7 + $0xb0] sm:$0xf]
        %v1777 = vld [vmem:[%s7 + $0xb4] sm:$0xf]
        %v1778 = vld [vmem:[%s7 + $0xb8] sm:$0xf]
        %v1779 = vld [vmem:[%s7 + $0xbc] sm:$0xf]
        %v1780 = vld [vmem:[%s7 + $0xc0] sm:$0xf]
        %v1781 = vld [vmem:[%s7 + $0xc4] sm:$0xf]
        %v1782 = vld [vmem:[%s7 + $0xc8] sm:$0xf]
        %v1783 = vld [vmem:[%s7 + $0xcc] sm:$0xf]
        %v1784 = vld [vmem:[%s7 + $0xd0] sm:$0xf]
        %v1785 = vld [vmem:[%s7 + $0xd4] sm:$0xf]
        %v1786 = vld [vmem:[%s7 + $0xd8] sm:$0xf]
        %v1787 = vld [vmem:[%s7 + $0xdc] sm:$0xf]
        %v1788 = vld [vmem:[%s7 + $0xe0] sm:$0xf]
        %v1789 = vld [vmem:[%s7 + $0xe4] sm:$0xf]
        %v1790 = vld [vmem:[%s7 + $0xe8] sm:$0xf]
        %v1791 = vld [vmem:[%s7 + $0xec] sm:$0xf]
        %v1792 = vld [vmem:[%s7 + $0xf0] sm:$0xf]
        %v1793 = vld [vmem:[%s7 + $0xf4] sm:$0xf]
        %v1794 = vld [vmem:[%s7 + $0xf8] sm:$0xf]
        %v1795 = vld [vmem:[%s7 + $0xfc] sm:$0xf]
        %v1796 = vld [vmem:[%s7 + $0x100] sm:$0xf]
        %v1797 = vld [vmem:[%s7 + $0x104] sm:$0xf]
        %v1798 = vld [vmem:[%s7 + $0x108] sm:$0xf]
        %v1799 = vld [vmem:[%s7 + $0x10c] sm:$0xf]
        %v1800 = vld [vmem:[%s7 + $0x110] sm:$0xf]
        %v1801 = vld [vmem:[%s7 + $0x114] sm:$0xf]
        %v1802 = vld [vmem:[%s7 + $0x118] sm:$0xf]
        %v1803 = vld [vmem:[%s7 + $0x11c] sm:$0xf]
        %v1804 = vld [vmem:[%s8] sm:$0x1]
        %v1806 = vlaneseq
        %v1807 = vshrl.u32 %v1806, 7
        %v1808 = vsub.s32 0, %v1807
        %v1809 = vrot.slane %v1804, %v1808
        %v1883 = vunpack.c.l.b16 %v1732
        %v1884 = vunpack.c.l.b16 %v1733
        %v1885 = vunpack.c.l.b16 %v1734
        %v1886 = vunpack.c.l.b16 %v1735
        %v1887 = vunpack.c.l.b16 %v1736
        %v1888 = vunpack.c.l.b16 %v1737
        %v1889 = vunpack.c.l.b16 %v1738
        %v1890 = vunpack.c.l.b16 %v1739
        %v1891 = vunpack.c.l.b16 %v1740
        %v1892 = vunpack.c.l.b16 %v1741
        %v1893 = vunpack.c.l.b16 %v1742
        %v1894 = vunpack.c.l.b16 %v1743
        %v1895 = vunpack.c.l.b16 %v1744
        %v1896 = vunpack.c.l.b16 %v1745
        %v1897 = vunpack.c.l.b16 %v1746
        %v1898 = vunpack.c.l.b16 %v1747
        %v1899 = vunpack.c.l.b16 %v1748
        %v1900 = vunpack.c.l.b16 %v1749
        %v1901 = vunpack.c.l.b16 %v1750
        %v1902 = vunpack.c.l.b16 %v1751
        %v1903 = vunpack.c.l.b16 %v1752
        %v1904 = vunpack.c.l.b16 %v1753
        %v1905 = vunpack.c.l.b16 %v1754
        %v1906 = vunpack.c.l.b16 %v1755
        %v1907 = vunpack.c.l.b16 %v1756
        %v1908 = vunpack.c.l.b16 %v1757
        %v1909 = vunpack.c.l.b16 %v1758
        %v1910 = vunpack.c.l.b16 %v1759
        %v1911 = vunpack.c.l.b16 %v1760
        %v1912 = vunpack.c.l.b16 %v1761
        %v1913 = vunpack.c.l.b16 %v1762
        %v1914 = vunpack.c.l.b16 %v1763
        %v1915 = vunpack.c.l.b16 %v1764
        %v1916 = vunpack.c.l.b16 %v1765
        %v1917 = vunpack.c.l.b16 %v1766
        %v1918 = vunpack.c.l.b16 %v1767
        %v1919 = vunpack.c.l.b16 %v1768
        %v1920 = vunpack.c.l.b16 %v1769
        %v1921 = vunpack.c.l.b16 %v1770
        %v1922 = vunpack.c.l.b16 %v1771
        %v1923 = vunpack.c.l.b16 %v1772
        %v1924 = vunpack.c.l.b16 %v1773
        %v1925 = vunpack.c.l.b16 %v1774
        %v1926 = vunpack.c.l.b16 %v1775
        %v1927 = vunpack.c.l.b16 %v1776
        %v1928 = vunpack.c.l.b16 %v1777
        %v1929 = vunpack.c.l.b16 %v1778
        %v1930 = vunpack.c.l.b16 %v1779
        %v1931 = vunpack.c.l.b16 %v1780
        %v1932 = vunpack.c.l.b16 %v1781
        %v1933 = vunpack.c.l.b16 %v1782
        %v1934 = vunpack.c.l.b16 %v1783
        %v1935 = vunpack.c.l.b16 %v1784
        %v1936 = vunpack.c.l.b16 %v1785
        %v1937 = vunpack.c.l.b16 %v1786
        %v1938 = vunpack.c.l.b16 %v1787
        %v1939 = vunpack.c.l.b16 %v1788
        %v1940 = vunpack.c.l.b16 %v1789
        %v1941 = vunpack.c.l.b16 %v1790
        %v1942 = vunpack.c.l.b16 %v1791
        %v1943 = vunpack.c.l.b16 %v1792
        %v1944 = vunpack.c.l.b16 %v1793
        %v1945 = vunpack.c.l.b16 %v1794
        %v1946 = vunpack.c.l.b16 %v1795
        %v1947 = vunpack.c.l.b16 %v1796
        %v1948 = vunpack.c.l.b16 %v1797
        %v1949 = vunpack.c.l.b16 %v1798
        %v1950 = vunpack.c.l.b16 %v1799
        %v1951 = vunpack.c.l.b16 %v1800
        %v1952 = vunpack.c.l.b16 %v1801
        %v1953 = vunpack.c.l.b16 %v1802
        %v1954 = vunpack.c.l.b16 %v1803
        %v1955 = vpack.c.b16 %v1884, %v1883
        %v1956 = vpack.c.b16 %v1886, %v1885
        %v1957 = vpack.c.b16 %v1888, %v1887
        %v1958 = vpack.c.b16 %v1890, %v1889
        %v1959 = vpack.c.b16 %v1892, %v1891
        %v1960 = vpack.c.b16 %v1894, %v1893
        %v1961 = vpack.c.b16 %v1896, %v1895
        %v1962 = vpack.c.b16 %v1898, %v1897
        %v1963 = vpack.c.b16 %v1900, %v1899
        %v1964 = vpack.c.b16 %v1902, %v1901
        %v1965 = vpack.c.b16 %v1904, %v1903
        %v1966 = vpack.c.b16 %v1906, %v1905
        %v1967 = vpack.c.b16 %v1908, %v1907
        %v1968 = vpack.c.b16 %v1910, %v1909
        %v1969 = vpack.c.b16 %v1912, %v1911
        %v1970 = vpack.c.b16 %v1914, %v1913
        %v1971 = vpack.c.b16 %v1916, %v1915
        %v1972 = vpack.c.b16 %v1918, %v1917
        %v1973 = vpack.c.b16 %v1920, %v1919
        %v1974 = vpack.c.b16 %v1922, %v1921
        %v1975 = vpack.c.b16 %v1924, %v1923
        %v1976 = vpack.c.b16 %v1926, %v1925
        %v1977 = vpack.c.b16 %v1928, %v1927
        %v1978 = vpack.c.b16 %v1930, %v1929
        %v1979 = vpack.c.b16 %v1932, %v1931
        %v1980 = vpack.c.b16 %v1934, %v1933
        %v1981 = vpack.c.b16 %v1936, %v1935
        %v1982 = vpack.c.b16 %v1938, %v1937
        %v1983 = vpack.c.b16 %v1940, %v1939
        %v1984 = vpack.c.b16 %v1942, %v1941
        %v1985 = vpack.c.b16 %v1944, %v1943
        %v1986 = vpack.c.b16 %v1946, %v1945
        %v1987 = vpack.c.b16 %v1948, %v1947
        %v1988 = vpack.c.b16 %v1950, %v1949
        %v1989 = vpack.c.b16 %v1952, %v1951
        %v1990 = vpack.c.b16 %v1954, %v1953
        %v2028 = vsel %vm1243, %v1731, 0
        %2030 = vmatprep.subr.bf16.mxu0 0
        %2031 = vmatpush1.bf16.msra.mxu0 %v1962
        %2032 = vmatprep.subr.bf16.mxu0 0
        %2033 = vmatpush1.bf16.msra.mxu0 %v1961
        %2034 = vmatprep.subr.bf16.mxu0 0
        %2035 = vmatpush1.bf16.msra.mxu0 %v1960
        %2036 = vmatprep.subr.bf16.mxu0 0
        %2037 = vmatpush1.bf16.msra.mxu0 %v1959
        %2038 = vmatprep.subr.bf16.mxu0 0
        %2039 = vmatpush1.bf16.msra.mxu0 %v1958
        %2040 = vmatprep.subr.bf16.mxu0 0
        %2041 = vmatpush1.bf16.msra.mxu0 %v1957
        %2042 = vmatprep.subr.bf16.mxu0 0
        %2043 = vmatpush1.bf16.msra.mxu0 %v1956
        %2044 = vmatprep.subr.bf16.mxu0 0
        %2045 = vmatpush1.bf16.msra.mxu0 %v1955
        %2046 = vmatprep.subr.bf16.mxu0 0
        %2047 = vmatpush2.bf16.msra.mxu0 %v1970
        %2048 = vmatprep.subr.bf16.mxu0 0
        %2049 = vmatpush2.bf16.msra.mxu0 %v1969
        %2050 = vmatprep.subr.bf16.mxu0 0
        %2051 = vmatpush2.bf16.msra.mxu0 %v1968
        %2052 = vmatprep.subr.bf16.mxu0 0
        %2053 = vmatpush2.bf16.msra.mxu0 %v1967
        %2054 = vmatprep.subr.bf16.mxu0 0
        %2055 = vmatpush2.bf16.msra.mxu0 %v1966
        %2056 = vmatprep.subr.bf16.mxu0 0
        %2057 = vmatpush2.bf16.msra.mxu0 %v1965
        %2058 = vmatprep.subr.bf16.mxu0 0
        %2059 = vmatpush2.bf16.msra.mxu0 %v1964
        %2060 = vmatprep.subr.bf16.mxu0 0
        %2061 = vmatpush2.bf16.msra.mxu0 %v1963
        %2062 = vmatprep.mubr.bf16.mxu0 %v1728
        %2063 = vmatmul.mubr.bf16.gmra.mxu0 %v1727
        %v2064 = vpop.f32.mrf.mxu0
        %v2065 = vadd.f32 %v1809, %v2064
        %v2066 = vpop.f32.mrf.mxu0
        %v2067 = vpop.f32.mrf.mxu0
        %v2068 = vpop.f32.mrf.mxu0
        %2069 = vdwg.mxu0
        %2070 = vmatprep.subr.bf16.mxu0 0
        %2071 = vmatpush1.bf16.msra.mxu0 %v1978
        %2072 = vmatprep.subr.bf16.mxu0 0
        %2073 = vmatpush1.bf16.msra.mxu0 %v1977
        %2074 = vmatprep.subr.bf16.mxu0 0
        %2075 = vmatpush1.bf16.msra.mxu0 %v1976
        %2076 = vmatprep.subr.bf16.mxu0 0
        %2077 = vmatpush1.bf16.msra.mxu0 %v1975
        %2078 = vmatprep.subr.bf16.mxu0 0
        %2079 = vmatpush1.bf16.msra.mxu0 %v1974
        %2080 = vmatprep.subr.bf16.mxu0 0
        %2081 = vmatpush1.bf16.msra.mxu0 %v1973
        %2082 = vmatprep.subr.bf16.mxu0 0
        %2083 = vmatpush1.bf16.msra.mxu0 %v1972
        %2084 = vmatprep.subr.bf16.mxu0 0
        %2085 = vmatpush1.bf16.msra.mxu0 %v1971
        %2086 = vmatprep.subr.bf16.mxu0 0
        %2087 = vmatpush2.bf16.msra.mxu0 %v1986
        %2088 = vmatprep.subr.bf16.mxu0 0
        %2089 = vmatpush2.bf16.msra.mxu0 %v1985
        %2090 = vmatprep.subr.bf16.mxu0 0
        %2091 = vmatpush2.bf16.msra.mxu0 %v1984
        %2092 = vmatprep.subr.bf16.mxu0 0
        %2093 = vmatpush2.bf16.msra.mxu0 %v1983
        %2094 = vmatprep.subr.bf16.mxu0 0
        %2095 = vmatpush2.bf16.msra.mxu0 %v1982
        %2096 = vmatprep.subr.bf16.mxu0 0
        %2097 = vmatpush2.bf16.msra.mxu0 %v1981
        %2098 = vmatprep.subr.bf16.mxu0 0
        %2099 = vmatpush2.bf16.msra.mxu0 %v1980
        %2100 = vmatprep.subr.bf16.mxu0 0
        %2101 = vmatpush2.bf16.msra.mxu0 %v1979
        %2102 = vmatprep.mubr.bf16.mxu0 %v1730
        %2103 = vmatmul.mubr.bf16.gmra.mxu0 %v1729
        %v2104 = vpop.f32.mrf.mxu0
        %v2105 = vadd.f32 %v2065, %v2104
        %v2106 = vpop.f32.mrf.mxu0
        %v2107 = vpop.f32.mrf.mxu0
        %v2108 = vpop.f32.mrf.mxu0
        %2109 = vdwg.mxu0
        %2110 = vmatprep.subr.bf16.mxu0 0
        %2111 = vmatpush1.bf16.msra.mxu0 0
        %2112 = vmatprep.subr.bf16.mxu0 0
        %2113 = vmatpush1.bf16.msra.mxu0 0
        %2114 = vmatprep.subr.bf16.mxu0 0
        %2115 = vmatpush1.bf16.msra.mxu0 0
        %2116 = vmatprep.subr.bf16.mxu0 0
        %2117 = vmatpush1.bf16.msra.mxu0 0
        %2118 = vmatprep.subr.bf16.mxu0 0
        %2119 = vmatpush1.bf16.msra.mxu0 %v1990
        %2120 = vmatprep.subr.bf16.mxu0 0
        %2121 = vmatpush1.bf16.msra.mxu0 %v1989
        %2122 = vmatprep.subr.bf16.mxu0 0
        %2123 = vmatpush1.bf16.msra.mxu0 %v1988
        %2124 = vmatprep.subr.bf16.mxu0 0
        %2125 = vmatpush1.bf16.msra.mxu0 %v1987
        %2126 = vmatprep.subr.bf16.mxu0 0
        %2127 = vmatpush2.bf16.msra.mxu0 0
        %2128 = vmatprep.subr.bf16.mxu0 0
        %2129 = vmatpush2.bf16.msra.mxu0 0
        %2130 = vmatprep.subr.bf16.mxu0 0
        %2131 = vmatpush2.bf16.msra.mxu0 0
        %2132 = vmatprep.subr.bf16.mxu0 0
        %2133 = vmatpush2.bf16.msra.mxu0 0
        %2134 = vmatprep.subr.bf16.mxu0 0
        %2135 = vmatpush2.bf16.msra.mxu0 0
        %2136 = vmatprep.subr.bf16.mxu0 0
        %2137 = vmatpush2.bf16.msra.mxu0 0
        %2138 = vmatprep.subr.bf16.mxu0 0
        %2139 = vmatpush2.bf16.msra.mxu0 0
        %2140 = vmatprep.subr.bf16.mxu0 0
        %2141 = vmatpush2.bf16.msra.mxu0 0
        %2142 = vmatprep.mubr.bf16.mxu0 0
        %2143 = vmatmul.mubr.bf16.gmra.mxu0 %v2028
        %v2144 = vpop.f32.mrf.mxu0
        %v2145 = vadd.f32 %v2105, %v2144
        %v2146 = vpop.f32.mrf.mxu0
        %v2147 = vpop.f32.mrf.mxu0
        %v2148 = vpop.f32.mrf.mxu0
        %2149 = vdwg.mxu0
        %v2150 = vmax.f32 %v2145, 0.0
        %v2152 = vrot.slane %v2150, 1
        %2153 = vrot.lane.b32.xlu0 %v2152, 64
        %v2154 = vpop.permute.xlu0 %2153
        %v2156 = vrot.slane %v2150, 2
        %v2158 = vrot.slane %v2150, 3
        %2159 = vrot.lane.b32.xlu0 %v2158, 64
        %v2160 = vpop.permute.xlu0 %2159
        %v2162 = vsel %vm1243, %v2150, %v2154
        %v2163 = vsel %vm1243, %v2156, %v2160
        %v2164 = vpack.c.bf16 %v2162, %v2162
        %v2165 = vpack.c.bf16 %v2163, %v2163
        %v2166 = vld [vmem:[%s9] sm:$0xff]
        %v2167 = vld [vmem:[%s9 + $0x8] sm:$0xff]
        %v2168 = vld [vmem:[%s9 + $0x10] sm:$0xff]
        %v2169 = vld [vmem:[%s9 + $0x18] sm:$0xff]
        %v2170 = vld [vmem:[%s9 + $0x20] sm:$0xff]
        %v2171 = vld [vmem:[%s9 + $0x28] sm:$0xff]
        %v2172 = vld [vmem:[%s9 + $0x30] sm:$0xff]
        %v2173 = vld [vmem:[%s9 + $0x38] sm:$0xff]
        %v2174 = vld [vmem:[%s9 + $0x40] sm:$0xff]
        %v2175 = vld [vmem:[%s9 + $0x48] sm:$0xff]
        %v2176 = vld [vmem:[%s9 + $0x50] sm:$0xff]
        %v2177 = vld [vmem:[%s9 + $0x58] sm:$0xff]
        %v2178 = vld [vmem:[%s9 + $0x60] sm:$0xff]
        %v2179 = vld [vmem:[%s9 + $0x68] sm:$0xff]
        %v2180 = vld [vmem:[%s9 + $0x70] sm:$0xff]
        %v2181 = vld [vmem:[%s9 + $0x78] sm:$0xff]
        %v2182 = vld [vmem:[%s9 + $0x80] sm:$0xff]
        %v2183 = vld [vmem:[%s9 + $0x88] sm:$0xff]
        %v2184 = vld [vmem:[%s9 + $0x90] sm:$0xff]
        %v2185 = vld [vmem:[%s9 + $0x98] sm:$0xff]
        %v2186 = vld [vmem:[%s9 + $0xa0] sm:$0xff]
        %v2187 = vld [vmem:[%s9 + $0xa8] sm:$0xff]
        %v2188 = vld [vmem:[%s9 + $0xb0] sm:$0xff]
        %v2189 = vld [vmem:[%s9 + $0xb8] sm:$0xff]
        %v2190 = vld [vmem:[%s9 + $0xc0] sm:$0xff]
        %v2191 = vld [vmem:[%s9 + $0xc8] sm:$0xff]
        %v2192 = vld [vmem:[%s9 + $0xd0] sm:$0xff]
        %v2193 = vld [vmem:[%s9 + $0xd8] sm:$0xff]
        %v2194 = vld [vmem:[%s9 + $0xe0] sm:$0xff]
        %v2195 = vld [vmem:[%s9 + $0xe8] sm:$0xff]
        %v2196 = vld [vmem:[%s9 + $0xf0] sm:$0xff]
        %v2197 = vld [vmem:[%s9 + $0xf8] sm:$0xff]
        %v2198 = vld [vmem:[%s9 + $0x100] sm:$0xff]
        %v2199 = vld [vmem:[%s9 + $0x108] sm:$0xff]
        %v2200 = vld [vmem:[%s9 + $0x110] sm:$0xff]
        %v2201 = vld [vmem:[%s9 + $0x118] sm:$0xff]
        %v2202 = vld [vmem:[%s9 + $0x120] sm:$0xff]
        %v2203 = vld [vmem:[%s9 + $0x128] sm:$0xff]
        %v2204 = vld [vmem:[%s9 + $0x130] sm:$0xff]
        %v2205 = vld [vmem:[%s9 + $0x138] sm:$0xff]
        %v2206 = vld [vmem:[%s9 + $0x140] sm:$0xff]
        %v2207 = vld [vmem:[%s9 + $0x148] sm:$0xff]
        %v2208 = vld [vmem:[%s9 + $0x150] sm:$0xff]
        %v2209 = vld [vmem:[%s9 + $0x158] sm:$0xff]
        %v2210 = vld [vmem:[%s9 + $0x160] sm:$0xff]
        %v2211 = vld [vmem:[%s9 + $0x168] sm:$0xff]
        %v2212 = vld [vmem:[%s9 + $0x170] sm:$0xff]
        %v2213 = vld [vmem:[%s9 + $0x178] sm:$0xff]
        %v2214 = vld [vmem:[%s9 + $0x180] sm:$0xff]
        %v2215 = vld [vmem:[%s9 + $0x188] sm:$0xff]
        %v2216 = vld [vmem:[%s9 + $0x190] sm:$0xff]
        %v2217 = vld [vmem:[%s9 + $0x198] sm:$0xff]
        %v2218 = vld [vmem:[%s9 + $0x1a0] sm:$0xff]
        %v2219 = vld [vmem:[%s9 + $0x1a8] sm:$0xff]
        %v2220 = vld [vmem:[%s9 + $0x1b0] sm:$0xff]
        %v2221 = vld [vmem:[%s9 + $0x1b8] sm:$0xff]
        %v2222 = vld [vmem:[%s9 + $0x1c0] sm:$0xff]
        %v2223 = vld [vmem:[%s9 + $0x1c8] sm:$0xff]
        %v2224 = vld [vmem:[%s9 + $0x1d0] sm:$0xff]
        %v2225 = vld [vmem:[%s9 + $0x1d8] sm:$0xff]
        %v2226 = vld [vmem:[%s9 + $0x1e0] sm:$0xff]
        %v2227 = vld [vmem:[%s9 + $0x1e8] sm:$0xff]
        %v2228 = vld [vmem:[%s9 + $0x1f0] sm:$0xff]
        %v2229 = vld [vmem:[%s9 + $0x1f8] sm:$0xff]
        %v2230 = vld [vmem:[%s10] sm:$0xf]
        %v2295 = vunpack.c.l.b16 %v2166
        %v2296 = vunpack.c.h.b16 %v2166
        %v2297 = vunpack.c.l.b16 %v2167
        %v2298 = vunpack.c.h.b16 %v2167
        %v2299 = vunpack.c.l.b16 %v2168
        %v2300 = vunpack.c.h.b16 %v2168
        %v2301 = vunpack.c.l.b16 %v2169
        %v2302 = vunpack.c.h.b16 %v2169
        %v2303 = vunpack.c.l.b16 %v2170
        %v2304 = vunpack.c.h.b16 %v2170
        %v2305 = vunpack.c.l.b16 %v2171
        %v2306 = vunpack.c.h.b16 %v2171
        %v2307 = vunpack.c.l.b16 %v2172
        %v2308 = vunpack.c.h.b16 %v2172
        %v2309 = vunpack.c.l.b16 %v2173
        %v2310 = vunpack.c.h.b16 %v2173
        %v2311 = vunpack.c.l.b16 %v2174
        %v2312 = vunpack.c.h.b16 %v2174
        %v2313 = vunpack.c.l.b16 %v2175
        %v2314 = vunpack.c.h.b16 %v2175
        %v2315 = vunpack.c.l.b16 %v2176
        %v2316 = vunpack.c.h.b16 %v2176
        %v2317 = vunpack.c.l.b16 %v2177
        %v2318 = vunpack.c.h.b16 %v2177
        %v2319 = vunpack.c.l.b16 %v2178
        %v2320 = vunpack.c.h.b16 %v2178
        %v2321 = vunpack.c.l.b16 %v2179
        %v2322 = vunpack.c.h.b16 %v2179
        %v2323 = vunpack.c.l.b16 %v2180
        %v2324 = vunpack.c.h.b16 %v2180
        %v2325 = vunpack.c.l.b16 %v2181
        %v2326 = vunpack.c.h.b16 %v2181
        %v2327 = vunpack.c.l.b16 %v2182
        %v2328 = vunpack.c.h.b16 %v2182
        %v2329 = vunpack.c.l.b16 %v2183
        %v2330 = vunpack.c.h.b16 %v2183
        %v2331 = vunpack.c.l.b16 %v2184
        %v2332 = vunpack.c.h.b16 %v2184
        %v2333 = vunpack.c.l.b16 %v2185
        %v2334 = vunpack.c.h.b16 %v2185
        %v2335 = vunpack.c.l.b16 %v2186
        %v2336 = vunpack.c.h.b16 %v2186
        %v2337 = vunpack.c.l.b16 %v2187
        %v2338 = vunpack.c.h.b16 %v2187
        %v2339 = vunpack.c.l.b16 %v2188
        %v2340 = vunpack.c.h.b16 %v2188
        %v2341 = vunpack.c.l.b16 %v2189
        %v2342 = vunpack.c.h.b16 %v2189
        %v2343 = vunpack.c.l.b16 %v2190
        %v2344 = vunpack.c.h.b16 %v2190
        %v2345 = vunpack.c.l.b16 %v2191
        %v2346 = vunpack.c.h.b16 %v2191
        %v2347 = vunpack.c.l.b16 %v2192
        %v2348 = vunpack.c.h.b16 %v2192
        %v2349 = vunpack.c.l.b16 %v2193
        %v2350 = vunpack.c.h.b16 %v2193
        %v2351 = vunpack.c.l.b16 %v2194
        %v2352 = vunpack.c.h.b16 %v2194
        %v2353 = vunpack.c.l.b16 %v2195
        %v2354 = vunpack.c.h.b16 %v2195
        %v2355 = vunpack.c.l.b16 %v2196
        %v2356 = vunpack.c.h.b16 %v2196
        %v2357 = vunpack.c.l.b16 %v2197
        %v2358 = vunpack.c.h.b16 %v2197
        %v2359 = vunpack.c.l.b16 %v2198
        %v2360 = vunpack.c.h.b16 %v2198
        %v2361 = vunpack.c.l.b16 %v2199
        %v2362 = vunpack.c.h.b16 %v2199
        %v2363 = vunpack.c.l.b16 %v2200
        %v2364 = vunpack.c.h.b16 %v2200
        %v2365 = vunpack.c.l.b16 %v2201
        %v2366 = vunpack.c.h.b16 %v2201
        %v2367 = vunpack.c.l.b16 %v2202
        %v2368 = vunpack.c.h.b16 %v2202
        %v2369 = vunpack.c.l.b16 %v2203
        %v2370 = vunpack.c.h.b16 %v2203
        %v2371 = vunpack.c.l.b16 %v2204
        %v2372 = vunpack.c.h.b16 %v2204
        %v2373 = vunpack.c.l.b16 %v2205
        %v2374 = vunpack.c.h.b16 %v2205
        %v2375 = vunpack.c.l.b16 %v2206
        %v2376 = vunpack.c.h.b16 %v2206
        %v2377 = vunpack.c.l.b16 %v2207
        %v2378 = vunpack.c.h.b16 %v2207
        %v2379 = vunpack.c.l.b16 %v2208
        %v2380 = vunpack.c.h.b16 %v2208
        %v2381 = vunpack.c.l.b16 %v2209
        %v2382 = vunpack.c.h.b16 %v2209
        %v2383 = vunpack.c.l.b16 %v2210
        %v2384 = vunpack.c.h.b16 %v2210
        %v2385 = vunpack.c.l.b16 %v2211
        %v2386 = vunpack.c.h.b16 %v2211
        %v2387 = vunpack.c.l.b16 %v2212
        %v2388 = vunpack.c.h.b16 %v2212
        %v2389 = vunpack.c.l.b16 %v2213
        %v2390 = vunpack.c.h.b16 %v2213
        %v2391 = vunpack.c.l.b16 %v2214
        %v2392 = vunpack.c.h.b16 %v2214
        %v2393 = vunpack.c.l.b16 %v2215
        %v2394 = vunpack.c.h.b16 %v2215
        %v2395 = vunpack.c.l.b16 %v2216
        %v2396 = vunpack.c.h.b16 %v2216
        %v2397 = vunpack.c.l.b16 %v2217
        %v2398 = vunpack.c.h.b16 %v2217
        %v2399 = vunpack.c.l.b16 %v2218
        %v2400 = vunpack.c.h.b16 %v2218
        %v2401 = vunpack.c.l.b16 %v2219
        %v2402 = vunpack.c.h.b16 %v2219
        %v2403 = vunpack.c.l.b16 %v2220
        %v2404 = vunpack.c.h.b16 %v2220
        %v2405 = vunpack.c.l.b16 %v2221
        %v2406 = vunpack.c.h.b16 %v2221
        %v2407 = vunpack.c.l.b16 %v2222
        %v2408 = vunpack.c.h.b16 %v2222
        %v2409 = vunpack.c.l.b16 %v2223
        %v2410 = vunpack.c.h.b16 %v2223
        %v2411 = vunpack.c.l.b16 %v2224
        %v2412 = vunpack.c.h.b16 %v2224
        %v2413 = vunpack.c.l.b16 %v2225
        %v2414 = vunpack.c.h.b16 %v2225
        %v2415 = vunpack.c.l.b16 %v2226
        %v2416 = vunpack.c.h.b16 %v2226
        %v2417 = vunpack.c.l.b16 %v2227
        %v2418 = vunpack.c.h.b16 %v2227
        %v2419 = vunpack.c.l.b16 %v2228
        %v2420 = vunpack.c.h.b16 %v2228
        %v2421 = vunpack.c.l.b16 %v2229
        %v2422 = vunpack.c.h.b16 %v2229
        %v2423 = vpack.c.b16 %v2299, %v2295
        %v2424 = vpack.c.b16 %v2300, %v2296
        %v2425 = vpack.c.b16 %v2301, %v2297
        %v2426 = vpack.c.b16 %v2302, %v2298
        %v2427 = vpack.c.b16 %v2307, %v2303
        %v2428 = vpack.c.b16 %v2308, %v2304
        %v2429 = vpack.c.b16 %v2309, %v2305
        %v2430 = vpack.c.b16 %v2310, %v2306
        %v2431 = vpack.c.b16 %v2315, %v2311
        %v2432 = vpack.c.b16 %v2316, %v2312
        %v2433 = vpack.c.b16 %v2317, %v2313
        %v2434 = vpack.c.b16 %v2318, %v2314
        %v2435 = vpack.c.b16 %v2323, %v2319
        %v2436 = vpack.c.b16 %v2324, %v2320
        %v2437 = vpack.c.b16 %v2325, %v2321
        %v2438 = vpack.c.b16 %v2326, %v2322
        %v2439 = vpack.c.b16 %v2331, %v2327
        %v2440 = vpack.c.b16 %v2332, %v2328
        %v2441 = vpack.c.b16 %v2333, %v2329
        %v2442 = vpack.c.b16 %v2334, %v2330
        %v2443 = vpack.c.b16 %v2339, %v2335
        %v2444 = vpack.c.b16 %v2340, %v2336
        %v2445 = vpack.c.b16 %v2341, %v2337
        %v2446 = vpack.c.b16 %v2342, %v2338
        %v2447 = vpack.c.b16 %v2347, %v2343
        %v2448 = vpack.c.b16 %v2348, %v2344
        %v2449 = vpack.c.b16 %v2349, %v2345
        %v2450 = vpack.c.b16 %v2350, %v2346
        %v2451 = vpack.c.b16 %v2355, %v2351
        %v2452 = vpack.c.b16 %v2356, %v2352
        %v2453 = vpack.c.b16 %v2357, %v2353
        %v2454 = vpack.c.b16 %v2358, %v2354
        %v2455 = vpack.c.b16 %v2363, %v2359
        %v2456 = vpack.c.b16 %v2364, %v2360
        %v2457 = vpack.c.b16 %v2365, %v2361
        %v2458 = vpack.c.b16 %v2366, %v2362
        %v2459 = vpack.c.b16 %v2371, %v2367
        %v2460 = vpack.c.b16 %v2372, %v2368
        %v2461 = vpack.c.b16 %v2373, %v2369
        %v2462 = vpack.c.b16 %v2374, %v2370
        %v2463 = vpack.c.b16 %v2379, %v2375
        %v2464 = vpack.c.b16 %v2380, %v2376
        %v2465 = vpack.c.b16 %v2381, %v2377
        %v2466 = vpack.c.b16 %v2382, %v2378
        %v2467 = vpack.c.b16 %v2387, %v2383
        %v2468 = vpack.c.b16 %v2388, %v2384
        %v2469 = vpack.c.b16 %v2389, %v2385
        %v2470 = vpack.c.b16 %v2390, %v2386
        %v2471 = vpack.c.b16 %v2395, %v2391
        %v2472 = vpack.c.b16 %v2396, %v2392
        %v2473 = vpack.c.b16 %v2397, %v2393
        %v2474 = vpack.c.b16 %v2398, %v2394
        %v2475 = vpack.c.b16 %v2403, %v2399
        %v2476 = vpack.c.b16 %v2404, %v2400
        %v2477 = vpack.c.b16 %v2405, %v2401
        %v2478 = vpack.c.b16 %v2406, %v2402
        %v2479 = vpack.c.b16 %v2411, %v2407
        %v2480 = vpack.c.b16 %v2412, %v2408
        %v2481 = vpack.c.b16 %v2413, %v2409
        %v2482 = vpack.c.b16 %v2414, %v2410
        %v2483 = vpack.c.b16 %v2419, %v2415
        %v2484 = vpack.c.b16 %v2420, %v2416
        %v2485 = vpack.c.b16 %v2421, %v2417
        %v2486 = vpack.c.b16 %v2422, %v2418
        %v2552 = vlaneseq
        %v2553 = vshrl.u32 %v2552, 7
        %v2554 = vsub.s32 0, %v2553
        %v2555 = vrot.slane %v2230, %v2554
        %v2556 = vlaneseq
        %v2557 = vshrl.u32 %v2556, 7
        %v2558 = vsub.s32 1, %v2557
        %v2559 = vrot.slane %v2230, %v2558
        %v2560 = vlaneseq
        %v2561 = vshrl.u32 %v2560, 7
        %v2562 = vsub.s32 2, %v2561
        %v2563 = vrot.slane %v2230, %v2562
        %v2564 = vlaneseq
        %v2565 = vshrl.u32 %v2564, 7
        %v2566 = vsub.s32 3, %v2565
        %v2567 = vrot.slane %v2230, %v2566
        %2572 = vmatprep.subr.bf16.mxu0 %v2452
        %2573 = vmatpush1.bf16.msra.mxu0 %v2451
        %2574 = vmatprep.subr.bf16.mxu0 %v2448
        %2575 = vmatpush1.bf16.msra.mxu0 %v2447
        %2576 = vmatprep.subr.bf16.mxu0 %v2444
        %2577 = vmatpush1.bf16.msra.mxu0 %v2443
        %2578 = vmatprep.subr.bf16.mxu0 %v2440
        %2579 = vmatpush1.bf16.msra.mxu0 %v2439
        %2580 = vmatprep.subr.bf16.mxu0 %v2436
        %2581 = vmatpush1.bf16.msra.mxu0 %v2435
        %2582 = vmatprep.subr.bf16.mxu0 %v2432
        %2583 = vmatpush1.bf16.msra.mxu0 %v2431
        %2584 = vmatprep.subr.bf16.mxu0 %v2428
        %2585 = vmatpush1.bf16.msra.mxu0 %v2427
        %2586 = vmatprep.subr.bf16.mxu0 %v2424
        %2587 = vmatpush1.bf16.msra.mxu0 %v2423
        %2588 = vmatprep.subr.bf16.mxu0 %v2484
        %2589 = vmatpush2.bf16.msra.mxu0 %v2483
        %2590 = vmatprep.subr.bf16.mxu0 %v2480
        %2591 = vmatpush2.bf16.msra.mxu0 %v2479
        %2592 = vmatprep.subr.bf16.mxu0 %v2476
        %2593 = vmatpush2.bf16.msra.mxu0 %v2475
        %2594 = vmatprep.subr.bf16.mxu0 %v2472
        %2595 = vmatpush2.bf16.msra.mxu0 %v2471
        %2596 = vmatprep.subr.bf16.mxu0 %v2468
        %2597 = vmatpush2.bf16.msra.mxu0 %v2467
        %2598 = vmatprep.subr.bf16.mxu0 %v2464
        %2599 = vmatpush2.bf16.msra.mxu0 %v2463
        %2600 = vmatprep.subr.bf16.mxu0 %v2460
        %2601 = vmatpush2.bf16.msra.mxu0 %v2459
        %2602 = vmatprep.subr.bf16.mxu0 %v2456
        %2603 = vmatpush2.bf16.msra.mxu0 %v2455
        %2604 = vmatprep.mubr.bf16.mxu0 %v2165
        %2605 = vmatmul.mubr.bf16.gmra.mxu0 %v2164
        %v2606 = vpop.f32.mrf.mxu0
        %v2607 = vadd.f32 %v2555, %v2606
        %v2608 = vpop.f32.mrf.mxu0
        %v2609 = vadd.f32 %v2559, %v2608
        %v2610 = vpop.f32.mrf.mxu0
        %v2611 = vpop.f32.mrf.mxu0
        %2612 = vdwg.mxu0
        %2613 = vmatprep.subr.bf16.mxu0 %v2454
        %2614 = vmatpush1.bf16.msra.mxu0 %v2453
        %2615 = vmatprep.subr.bf16.mxu0 %v2450
        %2616 = vmatpush1.bf16.msra.mxu0 %v2449
        %2617 = vmatprep.subr.bf16.mxu0 %v2446
        %2618 = vmatpush1.bf16.msra.mxu0 %v2445
        %2619 = vmatprep.subr.bf16.mxu0 %v2442
        %2620 = vmatpush1.bf16.msra.mxu0 %v2441
        %2621 = vmatprep.subr.bf16.mxu0 %v2438
        %2622 = vmatpush1.bf16.msra.mxu0 %v2437
        %2623 = vmatprep.subr.bf16.mxu0 %v2434
        %2624 = vmatpush1.bf16.msra.mxu0 %v2433
        %2625 = vmatprep.subr.bf16.mxu0 %v2430
        %2626 = vmatpush1.bf16.msra.mxu0 %v2429
        %2627 = vmatprep.subr.bf16.mxu0 %v2426
        %2628 = vmatpush1.bf16.msra.mxu0 %v2425
        %2629 = vmatprep.subr.bf16.mxu0 %v2486
        %2630 = vmatpush2.bf16.msra.mxu0 %v2485
        %2631 = vmatprep.subr.bf16.mxu0 %v2482
        %2632 = vmatpush2.bf16.msra.mxu0 %v2481
        %2633 = vmatprep.subr.bf16.mxu0 %v2478
        %2634 = vmatpush2.bf16.msra.mxu0 %v2477
        %2635 = vmatprep.subr.bf16.mxu0 %v2474
        %2636 = vmatpush2.bf16.msra.mxu0 %v2473
        %2637 = vmatprep.subr.bf16.mxu0 %v2470
        %2638 = vmatpush2.bf16.msra.mxu0 %v2469
        %2639 = vmatprep.subr.bf16.mxu0 %v2466
        %2640 = vmatpush2.bf16.msra.mxu0 %v2465
        %2641 = vmatprep.subr.bf16.mxu0 %v2462
        %2642 = vmatpush2.bf16.msra.mxu0 %v2461
        %2643 = vmatprep.subr.bf16.mxu0 %v2458
        %2644 = vmatpush2.bf16.msra.mxu0 %v2457
        %2645 = vmatprep.mubr.bf16.mxu0 %v2165
        %2646 = vmatmul.mubr.bf16.gmra.mxu0 %v2164
        %v2647 = vpop.f32.mrf.mxu0
        %v2648 = vadd.f32 %v2563, %v2647
        %v2649 = vpop.f32.mrf.mxu0
        %v2650 = vadd.f32 %v2567, %v2649
        %v2651 = vpop.f32.mrf.mxu0
        %v2652 = vpop.f32.mrf.mxu0
        %2653 = vdwg.mxu0
        %v2654 = vmax.f32 %v2607, 0.0
        %v2655 = vmax.f32 %v2609, 0.0
        %v2656 = vmax.f32 %v2648, 0.0
        %v2657 = vmax.f32 %v2650, 0.0
        %v2658 = vpack.c.bf16 %v2654, %v2654
        %v2659 = vpack.c.bf16 %v2655, %v2655
        %v2660 = vld [vmem:[%s11] sm:$0xf]
        %v2661 = vld [vmem:[%s11 + $0x4] sm:$0xf]
        %v2662 = vld [vmem:[%s11 + $0x8] sm:$0xf]
        %v2663 = vld [vmem:[%s11 + $0xc] sm:$0xf]
        %v2664 = vld [vmem:[%s11 + $0x10] sm:$0xf]
        %v2665 = vld [vmem:[%s11 + $0x14] sm:$0xf]
        %v2666 = vld [vmem:[%s11 + $0x18] sm:$0xf]
        %v2667 = vld [vmem:[%s11 + $0x1c] sm:$0xf]
        %v2668 = vld [vmem:[%s11 + $0x20] sm:$0xf]
        %v2669 = vld [vmem:[%s11 + $0x24] sm:$0xf]
        %v2670 = vld [vmem:[%s11 + $0x28] sm:$0xf]
        %v2671 = vld [vmem:[%s11 + $0x2c] sm:$0xf]
        %v2672 = vld [vmem:[%s11 + $0x30] sm:$0xf]
        %v2673 = vld [vmem:[%s11 + $0x34] sm:$0xf]
        %v2674 = vld [vmem:[%s11 + $0x38] sm:$0xf]
        %v2675 = vld [vmem:[%s11 + $0x3c] sm:$0xf]
        %v2676 = vld [vmem:[%s11 + $0x40] sm:$0xf]
        %v2677 = vld [vmem:[%s11 + $0x44] sm:$0xf]
        %v2678 = vld [vmem:[%s11 + $0x48] sm:$0xf]
        %v2679 = vld [vmem:[%s11 + $0x4c] sm:$0xf]
        %v2680 = vld [vmem:[%s11 + $0x50] sm:$0xf]
        %v2681 = vld [vmem:[%s11 + $0x54] sm:$0xf]
        %v2682 = vld [vmem:[%s11 + $0x58] sm:$0xf]
        %v2683 = vld [vmem:[%s11 + $0x5c] sm:$0xf]
        %v2684 = vld [vmem:[%s11 + $0x60] sm:$0xf]
        %v2685 = vld [vmem:[%s11 + $0x64] sm:$0xf]
        %v2686 = vld [vmem:[%s11 + $0x68] sm:$0xf]
        %v2687 = vld [vmem:[%s11 + $0x6c] sm:$0xf]
        %v2688 = vld [vmem:[%s11 + $0x70] sm:$0xf]
        %v2689 = vld [vmem:[%s11 + $0x74] sm:$0xf]
        %v2690 = vld [vmem:[%s11 + $0x78] sm:$0xf]
        %v2691 = vld [vmem:[%s11 + $0x7c] sm:$0xf]
        %v2692 = vld [vmem:[%s12] sm:$0x1]
        %v2725 = vunpack.c.l.b16 %v2660
        %v2726 = vunpack.c.l.b16 %v2661
        %v2727 = vunpack.c.l.b16 %v2662
        %v2728 = vunpack.c.l.b16 %v2663
        %v2729 = vunpack.c.l.b16 %v2664
        %v2730 = vunpack.c.l.b16 %v2665
        %v2731 = vunpack.c.l.b16 %v2666
        %v2732 = vunpack.c.l.b16 %v2667
        %v2733 = vunpack.c.l.b16 %v2668
        %v2734 = vunpack.c.l.b16 %v2669
        %v2735 = vunpack.c.l.b16 %v2670
        %v2736 = vunpack.c.l.b16 %v2671
        %v2737 = vunpack.c.l.b16 %v2672
        %v2738 = vunpack.c.l.b16 %v2673
        %v2739 = vunpack.c.l.b16 %v2674
        %v2740 = vunpack.c.l.b16 %v2675
        %v2741 = vunpack.c.l.b16 %v2676
        %v2742 = vunpack.c.l.b16 %v2677
        %v2743 = vunpack.c.l.b16 %v2678
        %v2744 = vunpack.c.l.b16 %v2679
        %v2745 = vunpack.c.l.b16 %v2680
        %v2746 = vunpack.c.l.b16 %v2681
        %v2747 = vunpack.c.l.b16 %v2682
        %v2748 = vunpack.c.l.b16 %v2683
        %v2749 = vunpack.c.l.b16 %v2684
        %v2750 = vunpack.c.l.b16 %v2685
        %v2751 = vunpack.c.l.b16 %v2686
        %v2752 = vunpack.c.l.b16 %v2687
        %v2753 = vunpack.c.l.b16 %v2688
        %v2754 = vunpack.c.l.b16 %v2689
        %v2755 = vunpack.c.l.b16 %v2690
        %v2756 = vunpack.c.l.b16 %v2691
        %v2757 = vpack.c.b16 %v2726, %v2725
        %v2758 = vpack.c.b16 %v2728, %v2727
        %v2759 = vpack.c.b16 %v2730, %v2729
        %v2760 = vpack.c.b16 %v2732, %v2731
        %v2761 = vpack.c.b16 %v2734, %v2733
        %v2762 = vpack.c.b16 %v2736, %v2735
        %v2763 = vpack.c.b16 %v2738, %v2737
        %v2764 = vpack.c.b16 %v2740, %v2739
        %v2765 = vpack.c.b16 %v2742, %v2741
        %v2766 = vpack.c.b16 %v2744, %v2743
        %v2767 = vpack.c.b16 %v2746, %v2745
        %v2768 = vpack.c.b16 %v2748, %v2747
        %v2769 = vpack.c.b16 %v2750, %v2749
        %v2770 = vpack.c.b16 %v2752, %v2751
        %v2771 = vpack.c.b16 %v2754, %v2753
        %v2772 = vpack.c.b16 %v2756, %v2755
        %2789 = vmatprep.subr.bf16.mxu0 0
        %2790 = vmatpush1.bf16.msra.mxu0 %v2764
        %2791 = vmatprep.subr.bf16.mxu0 0
        %2792 = vmatpush1.bf16.msra.mxu0 %v2763
        %2793 = vmatprep.subr.bf16.mxu0 0
        %2794 = vmatpush1.bf16.msra.mxu0 %v2762
        %2795 = vmatprep.subr.bf16.mxu0 0
        %2796 = vmatpush1.bf16.msra.mxu0 %v2761
        %2797 = vmatprep.subr.bf16.mxu0 0
        %2798 = vmatpush1.bf16.msra.mxu0 %v2760
        %2799 = vmatprep.subr.bf16.mxu0 0
        %2800 = vmatpush1.bf16.msra.mxu0 %v2759
        %2801 = vmatprep.subr.bf16.mxu0 0
        %2802 = vmatpush1.bf16.msra.mxu0 %v2758
        %2803 = vmatprep.subr.bf16.mxu0 0
        %2804 = vmatpush1.bf16.msra.mxu0 %v2757
        %2805 = vmatprep.subr.bf16.mxu0 0
        %2806 = vmatpush2.bf16.msra.mxu0 %v2772
        %2807 = vmatprep.subr.bf16.mxu0 0
        %2808 = vmatpush2.bf16.msra.mxu0 %v2771
        %2809 = vmatprep.subr.bf16.mxu0 0
        %2810 = vmatpush2.bf16.msra.mxu0 %v2770
        %2811 = vmatprep.subr.bf16.mxu0 0
        %2812 = vmatpush2.bf16.msra.mxu0 %v2769
        %2813 = vmatprep.subr.bf16.mxu0 0
        %2814 = vmatpush2.bf16.msra.mxu0 %v2768
        %2815 = vmatprep.subr.bf16.mxu0 0
        %2816 = vmatpush2.bf16.msra.mxu0 %v2767
        %2817 = vmatprep.subr.bf16.mxu0 0
        %2818 = vmatpush2.bf16.msra.mxu0 %v2766
        %2819 = vmatprep.subr.bf16.mxu0 0
        %2820 = vmatpush2.bf16.msra.mxu0 %v2765
        %2821 = vmatprep.mubr.bf16.mxu0 %v2659
        %2822 = vmatmul.mubr.bf16.gmra.mxu0 %v2658
        %v2823 = vpop.f32.mrf.mxu0
        %v2824 = vadd.f32 %v2692, %v2823
        %v2825 = vpop.f32.mrf.mxu0
        %v2826 = vpop.f32.mrf.mxu0
        %v2827 = vpop.f32.mrf.mxu0
        %2828 = vdwg.mxu0
        %v2829 = vpack.c.bf16 %v2656, %v2656
        %v2830 = vpack.c.bf16 %v2657, %v2657
        %v2831 = vld [vmem:[%s13] sm:$0xf]
        %v2832 = vld [vmem:[%s13 + $0x4] sm:$0xf]
        %v2833 = vld [vmem:[%s13 + $0x8] sm:$0xf]
        %v2834 = vld [vmem:[%s13 + $0xc] sm:$0xf]
        %v2835 = vld [vmem:[%s13 + $0x10] sm:$0xf]
        %v2836 = vld [vmem:[%s13 + $0x14] sm:$0xf]
        %v2837 = vld [vmem:[%s13 + $0x18] sm:$0xf]
        %v2838 = vld [vmem:[%s13 + $0x1c] sm:$0xf]
        %v2839 = vld [vmem:[%s13 + $0x20] sm:$0xf]
        %v2840 = vld [vmem:[%s13 + $0x24] sm:$0xf]
        %v2841 = vld [vmem:[%s13 + $0x28] sm:$0xf]
        %v2842 = vld [vmem:[%s13 + $0x2c] sm:$0xf]
        %v2843 = vld [vmem:[%s13 + $0x30] sm:$0xf]
        %v2844 = vld [vmem:[%s13 + $0x34] sm:$0xf]
        %v2845 = vld [vmem:[%s13 + $0x38] sm:$0xf]
        %v2846 = vld [vmem:[%s13 + $0x3c] sm:$0xf]
        %v2847 = vld [vmem:[%s13 + $0x40] sm:$0xf]
        %v2848 = vld [vmem:[%s13 + $0x44] sm:$0xf]
        %v2849 = vld [vmem:[%s13 + $0x48] sm:$0xf]
        %v2850 = vld [vmem:[%s13 + $0x4c] sm:$0xf]
        %v2851 = vld [vmem:[%s13 + $0x50] sm:$0xf]
        %v2852 = vld [vmem:[%s13 + $0x54] sm:$0xf]
        %v2853 = vld [vmem:[%s13 + $0x58] sm:$0xf]
        %v2854 = vld [vmem:[%s13 + $0x5c] sm:$0xf]
        %v2855 = vld [vmem:[%s13 + $0x60] sm:$0xf]
        %v2856 = vld [vmem:[%s13 + $0x64] sm:$0xf]
        %v2857 = vld [vmem:[%s13 + $0x68] sm:$0xf]
        %v2858 = vld [vmem:[%s13 + $0x6c] sm:$0xf]
        %v2859 = vld [vmem:[%s13 + $0x70] sm:$0xf]
        %v2860 = vld [vmem:[%s13 + $0x74] sm:$0xf]
        %v2861 = vld [vmem:[%s13 + $0x78] sm:$0xf]
        %v2862 = vld [vmem:[%s13 + $0x7c] sm:$0xf]
        %v2863 = vld [vmem:[#allocation2] sm:$0x1]
        %v2896 = vunpack.c.l.b16 %v2831
        %v2897 = vunpack.c.l.b16 %v2832
        %v2898 = vunpack.c.l.b16 %v2833
        %v2899 = vunpack.c.l.b16 %v2834
        %v2900 = vunpack.c.l.b16 %v2835
        %v2901 = vunpack.c.l.b16 %v2836
        %v2902 = vunpack.c.l.b16 %v2837
        %v2903 = vunpack.c.l.b16 %v2838
        %v2904 = vunpack.c.l.b16 %v2839
        %v2905 = vunpack.c.l.b16 %v2840
        %v2906 = vunpack.c.l.b16 %v2841
        %v2907 = vunpack.c.l.b16 %v2842
        %v2908 = vunpack.c.l.b16 %v2843
        %v2909 = vunpack.c.l.b16 %v2844
        %v2910 = vunpack.c.l.b16 %v2845
        %v2911 = vunpack.c.l.b16 %v2846
        %v2912 = vunpack.c.l.b16 %v2847
        %v2913 = vunpack.c.l.b16 %v2848
        %v2914 = vunpack.c.l.b16 %v2849
        %v2915 = vunpack.c.l.b16 %v2850
        %v2916 = vunpack.c.l.b16 %v2851
        %v2917 = vunpack.c.l.b16 %v2852
        %v2918 = vunpack.c.l.b16 %v2853
        %v2919 = vunpack.c.l.b16 %v2854
        %v2920 = vunpack.c.l.b16 %v2855
        %v2921 = vunpack.c.l.b16 %v2856
        %v2922 = vunpack.c.l.b16 %v2857
        %v2923 = vunpack.c.l.b16 %v2858
        %v2924 = vunpack.c.l.b16 %v2859
        %v2925 = vunpack.c.l.b16 %v2860
        %v2926 = vunpack.c.l.b16 %v2861
        %v2927 = vunpack.c.l.b16 %v2862
        %v2928 = vpack.c.b16 %v2897, %v2896
        %v2929 = vpack.c.b16 %v2899, %v2898
        %v2930 = vpack.c.b16 %v2901, %v2900
        %v2931 = vpack.c.b16 %v2903, %v2902
        %v2932 = vpack.c.b16 %v2905, %v2904
        %v2933 = vpack.c.b16 %v2907, %v2906
        %v2934 = vpack.c.b16 %v2909, %v2908
        %v2935 = vpack.c.b16 %v2911, %v2910
        %v2936 = vpack.c.b16 %v2913, %v2912
        %v2937 = vpack.c.b16 %v2915, %v2914
        %v2938 = vpack.c.b16 %v2917, %v2916
        %v2939 = vpack.c.b16 %v2919, %v2918
        %v2940 = vpack.c.b16 %v2921, %v2920
        %v2941 = vpack.c.b16 %v2923, %v2922
        %v2942 = vpack.c.b16 %v2925, %v2924
        %v2943 = vpack.c.b16 %v2927, %v2926
        %2960 = vmatprep.subr.bf16.mxu0 0
        %2961 = vmatpush1.bf16.msra.mxu0 %v2935
        %2962 = vmatprep.subr.bf16.mxu0 0
        %2963 = vmatpush1.bf16.msra.mxu0 %v2934
        %2964 = vmatprep.subr.bf16.mxu0 0
        %2965 = vmatpush1.bf16.msra.mxu0 %v2933
        %2966 = vmatprep.subr.bf16.mxu0 0
        %2967 = vmatpush1.bf16.msra.mxu0 %v2932
        %2968 = vmatprep.subr.bf16.mxu0 0
        %2969 = vmatpush1.bf16.msra.mxu0 %v2931
        %2970 = vmatprep.subr.bf16.mxu0 0
        %2971 = vmatpush1.bf16.msra.mxu0 %v2930
        %2972 = vmatprep.subr.bf16.mxu0 0
        %2973 = vmatpush1.bf16.msra.mxu0 %v2929
        %2974 = vmatprep.subr.bf16.mxu0 0
        %2975 = vmatpush1.bf16.msra.mxu0 %v2928
        %2976 = vmatprep.subr.bf16.mxu0 0
        %2977 = vmatpush2.bf16.msra.mxu0 %v2943
        %2978 = vmatprep.subr.bf16.mxu0 0
        %2979 = vmatpush2.bf16.msra.mxu0 %v2942
        %2980 = vmatprep.subr.bf16.mxu0 0
        %2981 = vmatpush2.bf16.msra.mxu0 %v2941
        %2982 = vmatprep.subr.bf16.mxu0 0
        %2983 = vmatpush2.bf16.msra.mxu0 %v2940
        %2984 = vmatprep.subr.bf16.mxu0 0
        %2985 = vmatpush2.bf16.msra.mxu0 %v2939
        %2986 = vmatprep.subr.bf16.mxu0 0
        %2987 = vmatpush2.bf16.msra.mxu0 %v2938
        %2988 = vmatprep.subr.bf16.mxu0 0
        %2989 = vmatpush2.bf16.msra.mxu0 %v2937
        %2990 = vmatprep.subr.bf16.mxu0 0
        %2991 = vmatpush2.bf16.msra.mxu0 %v2936
        %2992 = vmatprep.mubr.bf16.mxu0 %v2830
        %2993 = vmatmul.mubr.bf16.gmra.mxu0 %v2829
        %v2994 = vpop.f32.mrf.mxu0
        %v2995 = vadd.f32 %v2863, %v2994
        %v2996 = vpop.f32.mrf.mxu0
        %v2997 = vpop.f32.mrf.mxu0
        %v2998 = vpop.f32.mrf.mxu0
        %2999 = vdwg.mxu0
        %vm3000 = vcmask 40960
        %v3001 = vsel %vm3000, %v2824, 0.0
        %3002 = vadd.xlane.f32.xlu0 %v3001
        %v3003 = vpop.xlane.xlu0 %3002
        %v3004 = vrcp.pop 6.0
        %v3005 = vmul.f32 %v3003, %v3004
        %v3006 = vsub.f32 %v2824, %v3005
        %3008 = vset.pattern.permute.xlu0 0
        %3009 = vperm.xlu0 %3008, %v2995
        %v3010 = vpop.permute.xlu0 %3009
        %v3012 = vadd.f32 %v3010, %v3006
        %3013 = vst.msk [vmem:[%s488] sm:$0x1] %vm3000, %v3012
        %s3014 = sand.u32 %s359, 1
        %s3015 = scalar_lea.sflag [#allocation4], %s3014
        %s3016 = sand.u32 %s359, 1
        %s3017 = scalar_lea.vmem [#allocation3], %s3016
        // Predicated region
        $region81: #{dueling_dqn_forward.1} parent=79 // pred_check
          %p3018 = pneg %p369
        $region82: #{dueling_dqn_forward.1} parent=79 // pred_check_branch
          %3020 = sbr.rel (%p3018) target = $region84
        $region83: #{dueling_dqn_forward.1} parent=79 // pred_region
          %s3022 = ssub.s32 16, 16
          %3023 = vsyncadd %s3015, %s3022
          %s3024 = smul.addr %s31, 16
          %s3025 = scalar_lea.hbm %s15, %s3024
          %s3027 = sshll.u32 %s3017, 4
          %s3028 = int_to_ptr.vmem [resolvable:$true] %s3027
          %3030 = dma.vmem_to_hbm [thread:$0]  %s3028, 16, %s3025, %s3015
        $region84: #{dueling_dqn_forward.1} parent=79 // pred_fallthru
          _
      $region80: #{dueling_dqn_forward.1} parent=5 // pred_fallthru
        _
      %p3031 = scmp.le.s32.totalorder 2, %s26
      // Predicated region
      $region85: #{dueling_dqn_forward.1} parent=5 // pred_check
        %p3032 = pneg %p3031
      $region86: #{dueling_dqn_forward.1} parent=5 // pred_check_branch
        %3034 = sbr.rel (%p3032) target = $region88
      $region87: #{dueling_dqn_forward.1} parent=5 // pred_region
        %s3035 = ssub.s32 %s26, 2
        // Predicated region
        $region89: #{dueling_dqn_forward.1} parent=87 // pred_check
          %p3036 = pneg %p375
        $region90: #{dueling_dqn_forward.1} parent=87 // pred_check_branch
          %3038 = sbr.rel (%p3036) target = $region92
        $region91: #{dueling_dqn_forward.1} parent=87 // pred_region
          %s3039 = sand.u32 %s360, 1
          %s3040 = scalar_lea.sflag [#allocation4], %s3039
          %s3041 = sand.u32 %s360, 1
          %s3042 = scalar_lea.vmem [#allocation3], %s3041
          %3043 = dma.done %s3040, 16
        $region92: #{dueling_dqn_forward.1} parent=87 // pred_fallthru
          _
      $region88: #{dueling_dqn_forward.1} parent=5 // pred_fallthru
        _
    $region6: #{dueling_dqn_forward.1} parent=1 // loop_footer
      %s30 = sadd.s32 1, %s26
    $region7: #{dueling_dqn_forward.1} parent=1 // loop_footer_branch
      %25 = sbr.rel target = $region3
    $region8: #{dueling_dqn_forward.1} parent=1 // loop_exit
      _
    %3044 = vsyncpa [#allocation4], 1
    %s3045 = scalar_lea.sflag [#allocation4], 1
    %3046 = vsyncpa %s3045, 1

</llo_original>
